<compile_context>
chip_gen: v7x
topology: tpu7x:2x2x1
jax: 0.10.0
libtpu: 0.0.40
codegen_flags: <defaults>
</compile_context>

<pallas_src>
import functools

import jax
import jax.numpy as jnp
from jax.experimental import pallas as pl
from jax.experimental.pallas import tpu as pltpu

LN_EPS = 1e-5  # torch.nn.LayerNorm default


def _round_up(x, m):
    return (x + m - 1) // m * m


# ---------------------------------------------------------------------------
# Kernel
# ---------------------------------------------------------------------------
def _decoder_res_kernel(x_ref, w1_ref, b1_ref, g_ref, beta_ref, w2_ref, b2_ref,
                        mask_ref, o_ref, *, true_h):
    # x_ref: (TM, Hp) row tile; weights/biases/mask are resident full blocks,
    # zero-padded out to Hp / Op lanes in prepare_params().
    x = x_ref[...]
    hp = x.shape[-1]
    w_dtype = w1_ref.dtype
    x_mm = x if x.dtype == w_dtype else x.astype(w_dtype)

    # --- MLP: Linear(H->H) -> LayerNorm(true H) -> ReLU -----------------------
    h = jnp.dot(x_mm, w1_ref[...], preferred_element_type=jnp.float32)
    h = h + b1_ref[...]                              # f32 bias; padded lanes stay 0
    inv_h = jnp.float32(1.0 / true_h)                # divide by the TRUE hidden size
    mean = jnp.sum(h, axis=-1, keepdims=True) * inv_h
    centered = h - mean
    if hp != true_h:
        # Zero padded lanes with the resident mask (no per-step iota/select).
        centered = centered * mask_ref[...]
    var = jnp.sum(centered * centered, axis=-1, keepdims=True) * inv_h
    ln = centered * jax.lax.rsqrt(var + LN_EPS)
    ln = ln * g_ref[...] + beta_ref[...]             # padded gamma/beta are 0
    mlp_out = jnp.maximum(ln, 0.0)                   # padded lanes remain 0

    # --- residual + final Linear(H->O) ----------------------------------------
    res = x.astype(jnp.float32) + mlp_out
    y = jnp.dot(res.astype(w_dtype), w2_ref[...],
                preferred_element_type=jnp.float32)
    y = y + b2_ref[...]
    o_ref[...] = y.astype(o_ref.dtype)


# ---------------------------------------------------------------------------
# Jitted implementation (padded weights supplied, all meta static)
# ---------------------------------------------------------------------------
@functools.partial(
    jax.jit,
    static_argnames=("true_h", "true_o", "tm", "single_buffer_weights",
                     "vmem_limit_bytes"))
def _decoder_res_impl(hidden_states, w1_p, b1_p, g_p, be_p, w2_p, b2_p, mask_p,
                      *, true_h, true_o, tm, single_buffer_weights,
                      vmem_limit_bytes):
    lead = hidden_states.shape[:-1]
    H = true_h
    Hp = w1_p.shape[0]
    Op = w2_p.shape[1]
    dt = hidden_states.dtype

    x2d = hidden_states.reshape(-1, H)
    N = x2d.shape[0]
    Np = _round_up(N, tm)

    # Skip the activation pad entirely when shapes are already aligned.
    if (Np, Hp) != (N, H):
        x2d = jnp.pad(x2d, ((0, Np - N), (0, Hp - H)))

    # Resident weights: single-buffered when supported (constant index_map).
    if single_buffer_weights:
        w_mode = dict(pipeline_mode=pl.Buffered(1))
    else:
        w_mode = {}
    const = lambda i: (0, 0)

    in_specs = [
        pl.BlockSpec((tm, Hp), lambda i: (i, 0)),          # x row tile (pipelined)
        pl.BlockSpec((Hp, Hp), const, **w_mode),           # W1, resident
        pl.BlockSpec((1, Hp), const, **w_mode),            # b1
        pl.BlockSpec((1, Hp), const, **w_mode),            # LayerNorm gamma
        pl.BlockSpec((1, Hp), const, **w_mode),            # LayerNorm beta
        pl.BlockSpec((Hp, Op), const, **w_mode),           # W2, resident
        pl.BlockSpec((1, Op), const, **w_mode),            # b2
        pl.BlockSpec((1, Hp), const, **w_mode),            # LN lane mask
    ]

    itemsize = jnp.dtype(dt).itemsize
    w_itemsize = jnp.dtype(w1_p.dtype).itemsize
    flops = 2 * Np * Hp * (Hp + Op)
    bytes_accessed = (itemsize * Np * (Hp + Op)
                      + w_itemsize * Hp * (Hp + Op)
                      + 4 * (5 * Hp + Op))
    cost = pl.CostEstimate(flops=flops, transcendentals=Np,
                           bytes_accessed=bytes_accessed)

    kernel = functools.partial(_decoder_res_kernel, true_h=H)
    out = pl.pallas_call(
        kernel,
        out_shape=jax.ShapeDtypeStruct((Np, Op), dt),
        grid_spec=pltpu.PrefetchScalarGridSpec(
            num_scalar_prefetch=0,
            grid=(Np // tm,),
            in_specs=in_specs,
            out_specs=pl.BlockSpec((tm, Op), lambda i: (i, 0)),  # lane-dense store
        ),
        compiler_params=pltpu.CompilerParams(
            dimension_semantics=("parallel",),
            vmem_limit_bytes=vmem_limit_bytes),
        cost_estimate=cost,
    )(x2d, w1_p, b1_p, g_p, be_p, w2_p, b2_p, mask_p)

    return out[:N, :true_o].reshape(*lead, true_o)


# ---------------------------------------------------------------------------
# Public wrapper
# ---------------------------------------------------------------------------
_SINGLE_BUFFER_WEIGHTS_OK = None  # tri-state: None = unknown, True/False = probed


def _vmem_limit_bytes(Hp, Op, tm, x_itemsize, w_itemsize):
    """VMEM limit derived from actual block sizes + headroom, below physical."""
    weights = 2 * w_itemsize * (Hp * Hp + Hp * Op)        # conservative: 2 buffers
    vecs = 2 * 4 * (5 * Hp + Op)                          # biases / gamma / beta / mask
    io = 2 * tm * x_itemsize * (Hp + Op)                  # double-buffered x & out tiles
    scratch = 3 * 4 * tm * Hp                             # f32 temporaries headroom
    est = weights + vecs + io + scratch
    limit = max(int(est * 1.5) + (4 << 20), 16 << 20)
    limit = min(limit, 100 << 20)                         # never above v5e/v6e usable
    try:
        cap = pltpu.get_tpu_info().vmem_capacity_bytes
        limit = min(limit, int(cap * 0.85))               # headroom on v7x (64 MiB/TC)
    except Exception:
        pass
    return int(limit)


def decoder_res_pallas(hidden_states, prepared, *, tm=512):
    """hidden_states: (..., H); prepared from prepare_params(). -> (..., O)."""
    global _SINGLE_BUFFER_WEIGHTS_OK
    H = prepared["hidden_size"]
    O = prepared["out_features"]
    if hidden_states.shape[-1] != H:
        raise ValueError("hidden_states last dim does not match prepared params")

    N = 1
    for d in hidden_states.shape[:-1]:
        N *= int(d)
    Hp = prepared["w1"].shape[0]
    Op = prepared["w2"].shape[1]

    # Row tile: big enough to amortize the ~0.35us per-step overhead, but keep
    # >= 2 grid steps when N > 8 so v7x megacore can split the parallel axis.
    tm = max(8, min(tm, _round_up(max(N, 1), 8)))
    if N > 8:
        tm = min(tm, _round_up((N + 1) // 2, 8))

    vmem_limit = _vmem_limit_bytes(Hp, Op, tm,
                                   jnp.dtype(hidden_states.dtype).itemsize,
                                   jnp.dtype(prepared["w1"].dtype).itemsize)

    args = (hidden_states, prepared["w1"], prepared["b1"], prepared["gamma"],
            prepared["beta"], prepared["w2"], prepared["b2"], prepared["mask"])
    kwargs = dict(true_h=H, true_o=O, tm=tm, vmem_limit_bytes=vmem_limit)

    if _SINGLE_BUFFER_WEIGHTS_OK is None:
        try:
            out = _decoder_res_impl(*args, single_buffer_weights=True, **kwargs)
            _SINGLE_BUFFER_WEIGHTS_OK = True
            return out
        except Exception:
            # pl.Buffered(1) not supported by this jax version; fall back to
            # default double-buffered resident weights (correctness unchanged).
            _SINGLE_BUFFER_WEIGHTS_OK = False
    return _decoder_res_impl(*args,
                             single_buffer_weights=_SINGLE_BUFFER_WEIGHTS_OK,
                             **kwargs)


# ---------------------------------------------------------------------------
# Parameter handling
# ---------------------------------------------------------------------------
def init_params(key, hidden_size, out_features):
    k1, k2, k3, k4 = jax.random.split(key, 4)
    scale1 = 1.0 / jnp.sqrt(hidden_size)
    return {
        # stored already transposed: (in, out)
        "w1": jax.random.uniform(k1, (hidden_size, hidden_size),
                                 jnp.float32, -scale1, scale1),
        "b1": jax.random.uniform(k2, (1, hidden_size),
                                 jnp.float32, -scale1, scale1),
        "gamma": jnp.ones((1, hidden_size), jnp.float32),
        "beta": jnp.zeros((1, hidden_size), jnp.float32),
        "w2": jax.random.uniform(k3, (hidden_size, out_features),
                                 jnp.float32, -scale1, scale1),
        "b2": jax.random.uniform(k4, (1, out_features),
                                 jnp.float32, -scale1, scale1),
    }


def prepare_params(params, compute_dtype=jnp.float32):
    """Pad & cast the weights ONCE (lane-dense Hp/Op), so per-call HBM traffic
    is only the activation stream.  compute_dtype=bf16 opts into bf16 MXU
    operands (explicit precision trade); LayerNorm/bias math stays f32."""
    w1, b1, gamma, beta, w2, b2 = (params["w1"], params["b1"], params["gamma"],
                                   params["beta"], params["w2"], params["b2"])
    H = int(w1.shape[0])
    O = int(w2.shape[1])
    Hp = _round_up(H, 128)
    Op = _round_up(O, 128)
    padH, padO = Hp - H, Op - O
    f32 = jnp.float32
    return {
        "w1": jnp.pad(w1.astype(compute_dtype), ((0, padH), (0, padH))),
        "b1": jnp.pad(b1.astype(f32).reshape(1, H), ((0, 0), (0, padH))),
        "gamma": jnp.pad(gamma.astype(f32).reshape(1, H), ((0, 0), (0, padH))),
        "beta": jnp.pad(beta.astype(f32).reshape(1, H), ((0, 0), (0, padH))),
        "w2": jnp.pad(w2.astype(compute_dtype), ((0, padH), (0, padO))),
        "b2": jnp.pad(b2.astype(f32).reshape(1, O), ((0, 0), (0, padO))),
        "mask": (jnp.arange(Hp) < H).astype(f32).reshape(1, Hp),
        "hidden_size": H,
        "out_features": O,
    }


def decoder_res_ref(hidden_states, params):
    """Pure-JAX reference matching the PyTorch forward."""
    x = hidden_states
    h = x @ params["w1"] + params["b1"][0]
    mean = jnp.mean(h, axis=-1, keepdims=True)
    var = jnp.mean((h - mean) ** 2, axis=-1, keepdims=True)
    ln = (h - mean) / jnp.sqrt(var + LN_EPS) * params["gamma"][0] + params["beta"][0]
    mlp_out = jax.nn.relu(ln)
    res = x + mlp_out
    return res @ params["w2"] + params["b2"][0]


if __name__ == "__main__":
    batch, seq, hidden, out_features = 2, 8, 32, 60
    key = jax.random.PRNGKey(0)
    k_x, k_p = jax.random.split(key)

    hidden_states = jax.random.normal(k_x, (batch, seq, hidden), jnp.float32)
    params = init_params(k_p, hidden, out_features)
    ref = decoder_res_ref(hidden_states, params)

    # f32 path (exactness check).
    prepared_f32 = prepare_params(params, jnp.float32)
    out = decoder_res_pallas(hidden_states, prepared_f32)
    out = jax.block_until_ready(out)
    assert out.shape == (batch, seq, out_features)
    assert jnp.allclose(out, ref, atol=1e-4, rtol=1e-4), "f32 mismatch vs reference"

    # bf16 path: bf16 MXU operands, f32 LayerNorm / residual math.
    prepared_bf16 = prepare_params(params, jnp.bfloat16)
    out_bf16 = decoder_res_pallas(hidden_states.astype(jnp.bfloat16), prepared_bf16)
    out_bf16 = jax.block_until_ready(out_bf16)
    assert out_bf16.shape == (batch, seq, out_features)
    assert out_bf16.dtype == jnp.bfloat16
    # tolerance scaled by output magnitude (tighter than a fixed 0.5 abs).
    tol = 5e-2 * float(jnp.max(jnp.abs(ref))) + 1e-2
    err = float(jnp.max(jnp.abs(out_bf16.astype(jnp.float32) - ref)))
    assert err < tol, f"bf16 output diverged: max_err={err:.4f} tol={tol:.4f}"

    print("KERNEL_OK")
</pallas_src>

<mosaic_0001>
module attributes {stable_mosaic.version = 11 : i64} {
  func.func @_decoder_res_kernel(%arg0: i32, %arg1: memref<8x128xf32, #tpu.memory_space<vmem>>, %arg2: memref<128x128xf32, #tpu.memory_space<vmem>>, %arg3: memref<1x128xf32, #tpu.memory_space<vmem>>, %arg4: memref<1x128xf32, #tpu.memory_space<vmem>>, %arg5: memref<1x128xf32, #tpu.memory_space<vmem>>, %arg6: memref<128x128xf32, #tpu.memory_space<vmem>>, %arg7: memref<1x128xf32, #tpu.memory_space<vmem>>, %arg8: memref<1x128xf32, #tpu.memory_space<vmem>>, %arg9: memref<8x128xf32, #tpu.memory_space<vmem>>) attributes {dimension_semantics = [#tpu.dimension_semantics<parallel>], iteration_bounds = array<i64: 2>, scalar_prefetch = 0 : i64, scratch_operands = 0 : i64, tpu.core_type = #tpu.core_type<tc>, window_params = [{transform_indices = @transform_0, window_bounds = array<i64: 8, 128>}, {pipeline_mode = #tpu.pipeline_mode<synchronous>, transform_indices = @transform_1, window_bounds = array<i64: 128, 128>}, {pipeline_mode = #tpu.pipeline_mode<synchronous>, transform_indices = @transform_2, window_bounds = array<i64: 1, 128>}, {pipeline_mode = #tpu.pipeline_mode<synchronous>, transform_indices = @transform_3, window_bounds = array<i64: 1, 128>}, {pipeline_mode = #tpu.pipeline_mode<synchronous>, transform_indices = @transform_4, window_bounds = array<i64: 1, 128>}, {pipeline_mode = #tpu.pipeline_mode<synchronous>, transform_indices = @transform_5, window_bounds = array<i64: 128, 128>}, {pipeline_mode = #tpu.pipeline_mode<synchronous>, transform_indices = @transform_6, window_bounds = array<i64: 1, 128>}, {pipeline_mode = #tpu.pipeline_mode<synchronous>, transform_indices = @transform_7, window_bounds = array<i64: 1, 128>}, {transform_indices = @transform_8, window_bounds = array<i64: 8, 128>}]} {
    %c0 = arith.constant 0 : index
    %c0_0 = arith.constant 0 : index
    %0 = vector.load %arg1[%c0, %c0_0] : memref<8x128xf32, #tpu.memory_space<vmem>>, vector<8x128xf32>
    %c0_1 = arith.constant 0 : index
    %c0_2 = arith.constant 0 : index
    %1 = vector.load %arg2[%c0_1, %c0_2] : memref<128x128xf32, #tpu.memory_space<vmem>>, vector<128x128xf32>
    %cst = arith.constant dense<0.000000e+00> : vector<8x128xf32>
    %2 = tpu.matmul %0, %1, %cst {dimension_numbers = #tpu.dot_dimension_numbers<[1], [0], [0], [1], [0, 0, 1, 1], [], []>} : vector<8x128xf32>, vector<128x128xf32>, vector<8x128xf32> -> vector<8x128xf32>
    %c0_3 = arith.constant 0 : index
    %c0_4 = arith.constant 0 : index
    %3 = vector.load %arg3[%c0_3, %c0_4] : memref<1x128xf32, #tpu.memory_space<vmem>>, vector<1x128xf32>
    %4 = vector.broadcast %3 : vector<1x128xf32> to vector<8x128xf32>
    %5 = arith.addf %2, %4 : vector<8x128xf32>
    %cst_5 = arith.constant dense<0.000000e+00> : vector<8xf32>
    %6 = vector.multi_reduction <add>, %5, %cst_5 [1] : vector<8x128xf32> to vector<8xf32>
    %7 = vector.shape_cast %6 : vector<8xf32> to vector<8x1xf32>
    %cst_6 = arith.constant 3.125000e-02 : f32
    %8 = vector.broadcast %cst_6 : f32 to vector<8x1xf32>
    %9 = arith.mulf %7, %8 : vector<8x1xf32>
    %10 = vector.broadcast %9 : vector<8x1xf32> to vector<8x128xf32>
    %11 = arith.subf %5, %10 : vector<8x128xf32>
    %c0_7 = arith.constant 0 : index
    %c0_8 = arith.constant 0 : index
    %12 = vector.load %arg8[%c0_7, %c0_8] : memref<1x128xf32, #tpu.memory_space<vmem>>, vector<1x128xf32>
    %13 = vector.broadcast %12 : vector<1x128xf32> to vector<8x128xf32>
    %14 = arith.mulf %11, %13 : vector<8x128xf32>
    %15 = arith.mulf %14, %14 : vector<8x128xf32>
    %cst_9 = arith.constant dense<0.000000e+00> : vector<8xf32>
    %16 = vector.multi_reduction <add>, %15, %cst_9 [1] : vector<8x128xf32> to vector<8xf32>
    %17 = vector.shape_cast %16 : vector<8xf32> to vector<8x1xf32>
    %cst_10 = arith.constant 3.125000e-02 : f32
    %18 = vector.broadcast %cst_10 : f32 to vector<8x1xf32>
    %19 = arith.mulf %17, %18 : vector<8x1xf32>
    %cst_11 = arith.constant 9.99999974E-6 : f32
    %20 = vector.broadcast %cst_11 : f32 to vector<8x1xf32>
    %21 = arith.addf %19, %20 : vector<8x1xf32>
    %22 = math.rsqrt %21 : vector<8x1xf32>
    %23 = vector.broadcast %22 : vector<8x1xf32> to vector<8x128xf32>
    %24 = arith.mulf %14, %23 : vector<8x128xf32>
    %c0_12 = arith.constant 0 : index
    %c0_13 = arith.constant 0 : index
    %25 = vector.load %arg4[%c0_12, %c0_13] : memref<1x128xf32, #tpu.memory_space<vmem>>, vector<1x128xf32>
    %26 = vector.broadcast %25 : vector<1x128xf32> to vector<8x128xf32>
    %27 = arith.mulf %24, %26 : vector<8x128xf32>
    %c0_14 = arith.constant 0 : index
    %c0_15 = arith.constant 0 : index
    %28 = vector.load %arg5[%c0_14, %c0_15] : memref<1x128xf32, #tpu.memory_space<vmem>>, vector<1x128xf32>
    %29 = vector.broadcast %28 : vector<1x128xf32> to vector<8x128xf32>
    %30 = arith.addf %27, %29 : vector<8x128xf32>
    %cst_16 = arith.constant 0.000000e+00 : f32
    %31 = vector.broadcast %cst_16 : f32 to vector<8x128xf32>
    %32 = arith.maximumf %30, %31 : vector<8x128xf32>
    %33 = arith.addf %0, %32 : vector<8x128xf32>
    %c0_17 = arith.constant 0 : index
    %c0_18 = arith.constant 0 : index
    %34 = vector.load %arg6[%c0_17, %c0_18] : memref<128x128xf32, #tpu.memory_space<vmem>>, vector<128x128xf32>
    %cst_19 = arith.constant dense<0.000000e+00> : vector<8x128xf32>
    %35 = tpu.matmul %33, %34, %cst_19 {dimension_numbers = #tpu.dot_dimension_numbers<[1], [0], [0], [1], [0, 0, 1, 1], [], []>} : vector<8x128xf32>, vector<128x128xf32>, vector<8x128xf32> -> vector<8x128xf32>
    %c0_20 = arith.constant 0 : index
    %c0_21 = arith.constant 0 : index
    %36 = vector.load %arg7[%c0_20, %c0_21] : memref<1x128xf32, #tpu.memory_space<vmem>>, vector<1x128xf32>
    %37 = vector.broadcast %36 : vector<1x128xf32> to vector<8x128xf32>
    %38 = arith.addf %35, %37 : vector<8x128xf32>
    %c0_22 = arith.constant 0 : index
    %c0_23 = arith.constant 0 : index
    %39 = vector.load %arg9[%c0_22, %c0_23] : memref<8x128xf32, #tpu.memory_space<vmem>>, vector<8x128xf32>
    tpu.vector_store %arg9[%c0_22, %c0_23], %38 {strides = array<i32>} : memref<8x128xf32, #tpu.memory_space<vmem>>, vector<8x128xf32>,
    return
  }
  func.func @transform_0(%arg0: i32) -> (i32, i32) {
    %c0_i32 = arith.constant 0 : i32
    %c0_i32_0 = arith.constant 0 : i32
    return %arg0, %c0_i32 : i32, i32
  }
  func.func @transform_1(%arg0: i32) -> (i32, i32) {
    %c0_i32 = arith.constant 0 : i32
    %c0_i32_0 = arith.constant 0 : i32
    %c0_i32_1 = arith.constant 0 : i32
    return %c0_i32, %c0_i32_0 : i32, i32
  }
  func.func @transform_2(%arg0: i32) -> (i32, i32) {
    %c0_i32 = arith.constant 0 : i32
    %c0_i32_0 = arith.constant 0 : i32
    %c0_i32_1 = arith.constant 0 : i32
    return %c0_i32, %c0_i32_0 : i32, i32
  }
  func.func @transform_3(%arg0: i32) -> (i32, i32) {
    %c0_i32 = arith.constant 0 : i32
    %c0_i32_0 = arith.constant 0 : i32
    %c0_i32_1 = arith.constant 0 : i32
    return %c0_i32, %c0_i32_0 : i32, i32
  }
  func.func @transform_4(%arg0: i32) -> (i32, i32) {
    %c0_i32 = arith.constant 0 : i32
    %c0_i32_0 = arith.constant 0 : i32
    %c0_i32_1 = arith.constant 0 : i32
    return %c0_i32, %c0_i32_0 : i32, i32
  }
  func.func @transform_5(%arg0: i32) -> (i32, i32) {
    %c0_i32 = arith.constant 0 : i32
    %c0_i32_0 = arith.constant 0 : i32
    %c0_i32_1 = arith.constant 0 : i32
    return %c0_i32, %c0_i32_0 : i32, i32
  }
  func.func @transform_6(%arg0: i32) -> (i32, i32) {
    %c0_i32 = arith.constant 0 : i32
    %c0_i32_0 = arith.constant 0 : i32
    %c0_i32_1 = arith.constant 0 : i32
    return %c0_i32, %c0_i32_0 : i32, i32
  }
  func.func @transform_7(%arg0: i32) -> (i32, i32) {
    %c0_i32 = arith.constant 0 : i32
    %c0_i32_0 = arith.constant 0 : i32
    %c0_i32_1 = arith.constant 0 : i32
    return %c0_i32, %c0_i32_0 : i32, i32
  }
  func.func @transform_8(%arg0: i32) -> (i32, i32) {
    %c0_i32 = arith.constant 0 : i32
    %c0_i32_0 = arith.constant 0 : i32
    return %arg0, %c0_i32 : i32, i32
  }
}

module attributes {stable_mosaic.version = 11 : i64} {
  func.func @_decoder_res_kernel(%arg0: i32, %arg1: memref<8x128xf32, #tpu.memory_space<vmem>>, %arg2: memref<128x128xf32, #tpu.memory_space<vmem>>, %arg3: memref<1x128xf32, #tpu.memory_space<vmem>>, %arg4: memref<1x128xf32, #tpu.memory_space<vmem>>, %arg5: memref<1x128xf32, #tpu.memory_space<vmem>>, %arg6: memref<128x128xf32, #tpu.memory_space<vmem>>, %arg7: memref<1x128xf32, #tpu.memory_space<vmem>>, %arg8: memref<1x128xf32, #tpu.memory_space<vmem>>, %arg9: memref<8x128xf32, #tpu.memory_space<vmem>>) attributes {dimension_semantics = [#tpu.dimension_semantics<parallel>], iteration_bounds = array<i64: 2>, scalar_prefetch = 0 : i64, scratch_operands = 0 : i64, tpu.core_type = #tpu.core_type<tc>, window_params = [{transform_indices = @transform_0, window_bounds = array<i64: 8, 128>}, {pipeline_mode = #tpu.pipeline_mode<synchronous>, transform_indices = @transform_1, window_bounds = array<i64: 128, 128>}, {pipeline_mode = #tpu.pipeline_mode<synchronous>, transform_indices = @transform_2, window_bounds = array<i64: 1, 128>}, {pipeline_mode = #tpu.pipeline_mode<synchronous>, transform_indices = @transform_3, window_bounds = array<i64: 1, 128>}, {pipeline_mode = #tpu.pipeline_mode<synchronous>, transform_indices = @transform_4, window_bounds = array<i64: 1, 128>}, {pipeline_mode = #tpu.pipeline_mode<synchronous>, transform_indices = @transform_5, window_bounds = array<i64: 128, 128>}, {pipeline_mode = #tpu.pipeline_mode<synchronous>, transform_indices = @transform_6, window_bounds = array<i64: 1, 128>}, {pipeline_mode = #tpu.pipeline_mode<synchronous>, transform_indices = @transform_7, window_bounds = array<i64: 1, 128>}, {transform_indices = @transform_8, window_bounds = array<i64: 8, 128>}]} {
    %c0 = arith.constant 0 : index
    %c0_0 = arith.constant 0 : index
    %0 = vector.load %arg1[%c0, %c0_0] : memref<8x128xf32, #tpu.memory_space<vmem>>, vector<8x128xf32>
    %c0_1 = arith.constant 0 : index
    %c0_2 = arith.constant 0 : index
    %1 = vector.load %arg2[%c0_1, %c0_2] : memref<128x128xf32, #tpu.memory_space<vmem>>, vector<128x128xf32>
    %cst = arith.constant dense<0.000000e+00> : vector<8x128xf32>
    %2 = tpu.matmul %0, %1, %cst {dimension_numbers = #tpu.dot_dimension_numbers<[1], [0], [0], [1], [0, 0, 1, 1], [], []>} : vector<8x128xf32>, vector<128x128xf32>, vector<8x128xf32> -> vector<8x128xf32>
    %c0_3 = arith.constant 0 : index
    %c0_4 = arith.constant 0 : index
    %3 = vector.load %arg3[%c0_3, %c0_4] : memref<1x128xf32, #tpu.memory_space<vmem>>, vector<1x128xf32>
    %4 = vector.broadcast %3 : vector<1x128xf32> to vector<8x128xf32>
    %5 = arith.addf %2, %4 : vector<8x128xf32>
    %cst_5 = arith.constant dense<0.000000e+00> : vector<8xf32>
    %6 = vector.multi_reduction <add>, %5, %cst_5 [1] : vector<8x128xf32> to vector<8xf32>
    %7 = vector.shape_cast %6 : vector<8xf32> to vector<8x1xf32>
    %cst_6 = arith.constant 3.125000e-02 : f32
    %8 = vector.broadcast %cst_6 : f32 to vector<8x1xf32>
    %9 = arith.mulf %7, %8 : vector<8x1xf32>
    %10 = vector.broadcast %9 : vector<8x1xf32> to vector<8x128xf32>
    %11 = arith.subf %5, %10 : vector<8x128xf32>
    %c0_7 = arith.constant 0 : index
    %c0_8 = arith.constant 0 : index
    %12 = vector.load %arg8[%c0_7, %c0_8] : memref<1x128xf32, #tpu.memory_space<vmem>>, vector<1x128xf32>
    %13 = vector.broadcast %12 : vector<1x128xf32> to vector<8x128xf32>
    %14 = arith.mulf %11, %13 : vector<8x128xf32>
    %15 = arith.mulf %14, %14 : vector<8x128xf32>
    %cst_9 = arith.constant dense<0.000000e+00> : vector<8xf32>
    %16 = vector.multi_reduction <add>, %15, %cst_9 [1] : vector<8x128xf32> to vector<8xf32>
    %17 = vector.shape_cast %16 : vector<8xf32> to vector<8x1xf32>
    %cst_10 = arith.constant 3.125000e-02 : f32
    %18 = vector.broadcast %cst_10 : f32 to vector<8x1xf32>
    %19 = arith.mulf %17, %18 : vector<8x1xf32>
    %cst_11 = arith.constant 9.99999974E-6 : f32
    %20 = vector.broadcast %cst_11 : f32 to vector<8x1xf32>
    %21 = arith.addf %19, %20 : vector<8x1xf32>
    %22 = math.rsqrt %21 : vector<8x1xf32>
    %23 = vector.broadcast %22 : vector<8x1xf32> to vector<8x128xf32>
    %24 = arith.mulf %14, %23 : vector<8x128xf32>
    %c0_12 = arith.constant 0 : index
    %c0_13 = arith.constant 0 : index
    %25 = vector.load %arg4[%c0_12, %c0_13] : memref<1x128xf32, #tpu.memory_space<vmem>>, vector<1x128xf32>
    %26 = vector.broadcast %25 : vector<1x128xf32> to vector<8x128xf32>
    %27 = arith.mulf %24, %26 : vector<8x128xf32>
    %c0_14 = arith.constant 0 : index
    %c0_15 = arith.constant 0 : index
    %28 = vector.load %arg5[%c0_14, %c0_15] : memref<1x128xf32, #tpu.memory_space<vmem>>, vector<1x128xf32>
    %29 = vector.broadcast %28 : vector<1x128xf32> to vector<8x128xf32>
    %30 = arith.addf %27, %29 : vector<8x128xf32>
    %cst_16 = arith.constant 0.000000e+00 : f32
    %31 = vector.broadcast %cst_16 : f32 to vector<8x128xf32>
    %32 = arith.maximumf %30, %31 : vector<8x128xf32>
    %33 = arith.addf %0, %32 : vector<8x128xf32>
    %c0_17 = arith.constant 0 : index
    %c0_18 = arith.constant 0 : index
    %34 = vector.load %arg6[%c0_17, %c0_18] : memref<128x128xf32, #tpu.memory_space<vmem>>, vector<128x128xf32>
    %cst_19 = arith.constant dense<0.000000e+00> : vector<8x128xf32>
    %35 = tpu.matmul %33, %34, %cst_19 {dimension_numbers = #tpu.dot_dimension_numbers<[1], [0], [0], [1], [0, 0, 1, 1], [], []>} : vector<8x128xf32>, vector<128x128xf32>, vector<8x128xf32> -> vector<8x128xf32>
    %c0_20 = arith.constant 0 : index
    %c0_21 = arith.constant 0 : index
    %36 = vector.load %arg7[%c0_20, %c0_21] : memref<1x128xf32, #tpu.memory_space<vmem>>, vector<1x128xf32>
    %37 = vector.broadcast %36 : vector<1x128xf32> to vector<8x128xf32>
    %38 = arith.addf %35, %37 : vector<8x128xf32>
    %c0_22 = arith.constant 0 : index
    %c0_23 = arith.constant 0 : index
    %39 = vector.load %arg9[%c0_22, %c0_23] : memref<8x128xf32, #tpu.memory_space<vmem>>, vector<8x128xf32>
    tpu.vector_store %arg9[%c0_22, %c0_23], %38 {strides = array<i32>} : memref<8x128xf32, #tpu.memory_space<vmem>>, vector<8x128xf32>,
    return
  }
  func.func @transform_0(%arg0: i32) -> (i32, i32) {
    %c0_i32 = arith.constant 0 : i32
    %c0_i32_0 = arith.constant 0 : i32
    return %arg0, %c0_i32 : i32, i32
  }
  func.func @transform_1(%arg0: i32) -> (i32, i32) {
    %c0_i32 = arith.constant 0 : i32
    %c0_i32_0 = arith.constant 0 : i32
    %c0_i32_1 = arith.constant 0 : i32
    return %c0_i32, %c0_i32_0 : i32, i32
  }
  func.func @transform_2(%arg0: i32) -> (i32, i32) {
    %c0_i32 = arith.constant 0 : i32
    %c0_i32_0 = arith.constant 0 : i32
    %c0_i32_1 = arith.constant 0 : i32
    return %c0_i32, %c0_i32_0 : i32, i32
  }
  func.func @transform_3(%arg0: i32) -> (i32, i32) {
    %c0_i32 = arith.constant 0 : i32
    %c0_i32_0 = arith.constant 0 : i32
    %c0_i32_1 = arith.constant 0 : i32
    return %c0_i32, %c0_i32_0 : i32, i32
  }
  func.func @transform_4(%arg0: i32) -> (i32, i32) {
    %c0_i32 = arith.constant 0 : i32
    %c0_i32_0 = arith.constant 0 : i32
    %c0_i32_1 = arith.constant 0 : i32
    return %c0_i32, %c0_i32_0 : i32, i32
  }
  func.func @transform_5(%arg0: i32) -> (i32, i32) {
    %c0_i32 = arith.constant 0 : i32
    %c0_i32_0 = arith.constant 0 : i32
    %c0_i32_1 = arith.constant 0 : i32
    return %c0_i32, %c0_i32_0 : i32, i32
  }
  func.func @transform_6(%arg0: i32) -> (i32, i32) {
    %c0_i32 = arith.constant 0 : i32
    %c0_i32_0 = arith.constant 0 : i32
    %c0_i32_1 = arith.constant 0 : i32
    return %c0_i32, %c0_i32_0 : i32, i32
  }
  func.func @transform_7(%arg0: i32) -> (i32, i32) {
    %c0_i32 = arith.constant 0 : i32
    %c0_i32_0 = arith.constant 0 : i32
    %c0_i32_1 = arith.constant 0 : i32
    return %c0_i32, %c0_i32_0 : i32, i32
  }
  func.func @transform_8(%arg0: i32) -> (i32, i32) {
    %c0_i32 = arith.constant 0 : i32
    %c0_i32_0 = arith.constant 0 : i32
    return %arg0, %c0_i32 : i32, i32
  }
}

</mosaic_0001>

<llo_original>
// kernel: _decoder_res_impl.1
$region0: #{_decoder_res_impl.1}
  #allocation0 [shape = 'u32[]', space=smem, size = 0x4, offset = 0x4, fixed_abs, tag = 'smem constant byte address 0x4 - core index']
  #allocation1 [shape = 'u32[144,128]{1,0:T(1,128)}', space=vmem, size = 0x12000, scoped, tag = 'internal scratch']
  %s0 = inlined_call_operand.vmem [shape: f32[16,128], index: 0, kind: input, shape index: {}]
  %s1 = inlined_call_operand.hbm [shape: f32[128,128], index: 1, kind: input, shape index: {}]
  %s2 = inlined_call_operand.vmem [shape: f32[1,128], index: 2, kind: input, shape index: {}]
  %s3 = inlined_call_operand.vmem [shape: f32[1,128], index: 3, kind: input, shape index: {}]
  %s4 = inlined_call_operand.vmem [shape: f32[1,128], index: 4, kind: input, shape index: {}]
  %s5 = inlined_call_operand.hbm [shape: f32[128,128], index: 5, kind: input, shape index: {}]
  %s6 = inlined_call_operand.vmem [shape: f32[1,128], index: 6, kind: input, shape index: {}]
  %s7 = inlined_call_operand.vmem [shape: f32[1,128], index: 7, kind: input, shape index: {}]
  %s8 = inlined_call_operand.vmem [shape: f32[16,128], index: 8, kind: output, shape index: {}]
  %s9 = sld [smem:[#allocation0]]
  $region73: #{_decoder_res_impl.1} parent=0
    _
  %s11 = ssub.s32 1, %s9
  %s12 = scalar_select 0, %s11, %s9
  $region1: #{_decoder_res_impl.1} parent=0
    #allocation2 [shape = 'u8[65536]{0}', space=vmem, size = 0x10000, scoped, tag = 'input window, operand 1, single buffered']
    #allocation3 [shape = 's32[2]{0}', space=sflag, size = 0x8, scoped, tag = 'scoped memory for _decoder_res_impl.1']
    #allocation4 [shape = 'u8[65536]{0}', space=vmem, size = 0x10000, scoped, tag = 'input window, operand 5, single buffered']
    #allocation5 [shape = 's32[1]{0}', space=sflag, size = 0x4, scoped, tag = 'scoped memory for _decoder_res_impl.1']
    %13 = vsyncpa [#allocation3], 0
    %14 = vsyncpa [#allocation5], 0
    loop: start=0, step=1, limit=4
    $region2: #{_decoder_res_impl.1} parent=1 // loop_pre_header
      _
    $region3: #{_decoder_res_impl.1} parent=1 // loop_header
      %s16 = sphi 0, %s20
      %p17 = scmp.ge.s32.totalorder %s16, 4
      %s26 = sphi 0, %s28
      %s29 = sphi 0, %s26
      %s30 = sphi 0, %s29
      %s46 = sphi 0, %s30
      %s50 = sphi 0, %s50
      %s52 = sphi 0, %s50
      %s53 = sphi 0, %s52
      %s67 = sphi 0, %s53
      %s71 = sphi 0, %s71
      %s73 = sphi 0, %s71
      %s74 = sphi 0, %s73
      %s88 = sphi 0, %s74
      %s92 = sphi 0, %s92
      %s94 = sphi 0, %s92
      %s95 = sphi 0, %s94
      %s109 = sphi 0, %s95
      %s113 = sphi 0, %s113
      %s115 = sphi 0, %s113
      %s116 = sphi 0, %s115
      %s130 = sphi 0, %s116
      %s134 = sphi 0, %s134
      %s136 = sphi 0, %s134
      %s137 = sphi 0, %s136
      %s151 = sphi 0, %s137
      %s155 = sphi 0, %s155
      %s157 = sphi 0, %s155
      %s158 = sphi 0, %s157
      %s172 = sphi 0, %s158
      %s176 = sphi 0, %s176
      %s178 = sphi 0, %s176
      %s179 = sphi 0, %s178
      %s193 = sphi 0, %s179
      %s199 = sphi 0, %s201
      %s202 = sphi 0, %s199
      %s203 = sphi 0, %s202
      %s219 = sphi 0, %s203
    $region4: #{_decoder_res_impl.1} parent=1 // loop_header_branch
      %19 = sbr.rel (%p17) target = $region8
    $region5: #{_decoder_res_impl.1} parent=1 // loop_body
      %s21 = ssub.s32 %s16, 1
      %s22 = ssub.s32 %s16, 2
      %s23 = sadd.s32 %s16, 1
      %s24 = ssub.s32 %s16, %s23
      %p25 = scmp.eq.s32.totalorder %s24, 0
      %s27 = sadd.s32 %s26, 1
      %s28 = scalar_select %p25, %s26, %s27
      %p31 = pneg %p25
      %p32 = scmp.eq.s32.totalorder %s16, 1
      %p33 = por %p31, %p32
      %p34 = scmp.ne.s32.totalorder %s26, %s29
      %p35 = scmp.eq.s32.totalorder %s16, 0
      %p36 = por %p34, %p35
      %p37 = scmp.ne.s32.totalorder %s26, %s29
      %p38 = scmp.eq.s32.totalorder %s21, 1
      %p39 = por %p37, %p38
      %p40 = scmp.ne.s32.totalorder %s29, %s30
      %p41 = scmp.eq.s32.totalorder %s21, 0
      %p42 = por %p40, %p41
      %p43 = scmp.ne.s32.totalorder %s29, %s30
      %p44 = scmp.eq.s32.totalorder %s22, 1
      %p45 = por %p43, %p44
      %p47 = scmp.ne.s32.totalorder %s30, %s46
      %p48 = scmp.eq.s32.totalorder %s22, 0
      %p49 = por %p47, %p48
      %s51 = sadd.s32 %s50, 1
      %p54 = scmp.eq.s32.totalorder %s16, 1
      %p55 = scmp.ne.s32.totalorder %s50, %s52
      %p56 = scmp.eq.s32.totalorder %s16, 0
      %p57 = por %p55, %p56
      %p58 = scmp.ne.s32.totalorder %s50, %s52
      %p59 = scmp.eq.s32.totalorder %s21, 1
      %p60 = por %p58, %p59
      %p61 = scmp.ne.s32.totalorder %s52, %s53
      %p62 = scmp.eq.s32.totalorder %s21, 0
      %p63 = por %p61, %p62
      %p64 = scmp.ne.s32.totalorder %s52, %s53
      %p65 = scmp.eq.s32.totalorder %s22, 1
      %p66 = por %p64, %p65
      %p68 = scmp.ne.s32.totalorder %s53, %s67
      %p69 = scmp.eq.s32.totalorder %s22, 0
      %p70 = por %p68, %p69
      %s72 = sadd.s32 %s71, 1
      %p75 = scmp.eq.s32.totalorder %s16, 1
      %p76 = scmp.ne.s32.totalorder %s71, %s73
      %p77 = scmp.eq.s32.totalorder %s16, 0
      %p78 = por %p76, %p77
      %p79 = scmp.ne.s32.totalorder %s71, %s73
      %p80 = scmp.eq.s32.totalorder %s21, 1
      %p81 = por %p79, %p80
      %p82 = scmp.ne.s32.totalorder %s73, %s74
      %p83 = scmp.eq.s32.totalorder %s21, 0
      %p84 = por %p82, %p83
      %p85 = scmp.ne.s32.totalorder %s73, %s74
      %p86 = scmp.eq.s32.totalorder %s22, 1
      %p87 = por %p85, %p86
      %p89 = scmp.ne.s32.totalorder %s74, %s88
      %p90 = scmp.eq.s32.totalorder %s22, 0
      %p91 = por %p89, %p90
      %s93 = sadd.s32 %s92, 1
      %p96 = scmp.eq.s32.totalorder %s16, 1
      %p97 = scmp.ne.s32.totalorder %s92, %s94
      %p98 = scmp.eq.s32.totalorder %s16, 0
      %p99 = por %p97, %p98
      %p100 = scmp.ne.s32.totalorder %s92, %s94
      %p101 = scmp.eq.s32.totalorder %s21, 1
      %p102 = por %p100, %p101
      %p103 = scmp.ne.s32.totalorder %s94, %s95
      %p104 = scmp.eq.s32.totalorder %s21, 0
      %p105 = por %p103, %p104
      %p106 = scmp.ne.s32.totalorder %s94, %s95
      %p107 = scmp.eq.s32.totalorder %s22, 1
      %p108 = por %p106, %p107
      %p110 = scmp.ne.s32.totalorder %s95, %s109
      %p111 = scmp.eq.s32.totalorder %s22, 0
      %p112 = por %p110, %p111
      %s114 = sadd.s32 %s113, 1
      %p117 = scmp.eq.s32.totalorder %s16, 1
      %p118 = scmp.ne.s32.totalorder %s113, %s115
      %p119 = scmp.eq.s32.totalorder %s16, 0
      %p120 = por %p118, %p119
      %p121 = scmp.ne.s32.totalorder %s113, %s115
      %p122 = scmp.eq.s32.totalorder %s21, 1
      %p123 = por %p121, %p122
      %p124 = scmp.ne.s32.totalorder %s115, %s116
      %p125 = scmp.eq.s32.totalorder %s21, 0
      %p126 = por %p124, %p125
      %p127 = scmp.ne.s32.totalorder %s115, %s116
      %p128 = scmp.eq.s32.totalorder %s22, 1
      %p129 = por %p127, %p128
      %p131 = scmp.ne.s32.totalorder %s116, %s130
      %p132 = scmp.eq.s32.totalorder %s22, 0
      %p133 = por %p131, %p132
      %s135 = sadd.s32 %s134, 1
      %p138 = scmp.eq.s32.totalorder %s16, 1
      %p139 = scmp.ne.s32.totalorder %s134, %s136
      %p140 = scmp.eq.s32.totalorder %s16, 0
      %p141 = por %p139, %p140
      %p142 = scmp.ne.s32.totalorder %s134, %s136
      %p143 = scmp.eq.s32.totalorder %s21, 1
      %p144 = por %p142, %p143
      %p145 = scmp.ne.s32.totalorder %s136, %s137
      %p146 = scmp.eq.s32.totalorder %s21, 0
      %p147 = por %p145, %p146
      %p148 = scmp.ne.s32.totalorder %s136, %s137
      %p149 = scmp.eq.s32.totalorder %s22, 1
      %p150 = por %p148, %p149
      %p152 = scmp.ne.s32.totalorder %s137, %s151
      %p153 = scmp.eq.s32.totalorder %s22, 0
      %p154 = por %p152, %p153
      %s156 = sadd.s32 %s155, 1
      %p159 = scmp.eq.s32.totalorder %s16, 1
      %p160 = scmp.ne.s32.totalorder %s155, %s157
      %p161 = scmp.eq.s32.totalorder %s16, 0
      %p162 = por %p160, %p161
      %p163 = scmp.ne.s32.totalorder %s155, %s157
      %p164 = scmp.eq.s32.totalorder %s21, 1
      %p165 = por %p163, %p164
      %p166 = scmp.ne.s32.totalorder %s157, %s158
      %p167 = scmp.eq.s32.totalorder %s21, 0
      %p168 = por %p166, %p167
      %p169 = scmp.ne.s32.totalorder %s157, %s158
      %p170 = scmp.eq.s32.totalorder %s22, 1
      %p171 = por %p169, %p170
      %p173 = scmp.ne.s32.totalorder %s158, %s172
      %p174 = scmp.eq.s32.totalorder %s22, 0
      %p175 = por %p173, %p174
      %s177 = sadd.s32 %s176, 1
      %p180 = scmp.eq.s32.totalorder %s16, 1
      %p181 = scmp.ne.s32.totalorder %s176, %s178
      %p182 = scmp.eq.s32.totalorder %s16, 0
      %p183 = por %p181, %p182
      %p184 = scmp.ne.s32.totalorder %s176, %s178
      %p185 = scmp.eq.s32.totalorder %s21, 1
      %p186 = por %p184, %p185
      %p187 = scmp.ne.s32.totalorder %s178, %s179
      %p188 = scmp.eq.s32.totalorder %s21, 0
      %p189 = por %p187, %p188
      %p190 = scmp.ne.s32.totalorder %s178, %s179
      %p191 = scmp.eq.s32.totalorder %s22, 1
      %p192 = por %p190, %p191
      %p194 = scmp.ne.s32.totalorder %s179, %s193
      %p195 = scmp.eq.s32.totalorder %s22, 0
      %p196 = por %p194, %p195
      %s197 = ssub.s32 %s16, %s23
      %p198 = scmp.eq.s32.totalorder %s197, 0
      %s200 = sadd.s32 %s199, 1
      %s201 = scalar_select %p198, %s199, %s200
      %p204 = pneg %p198
      %p205 = scmp.eq.s32.totalorder %s16, 1
      %p206 = por %p204, %p205
      %p207 = scmp.ne.s32.totalorder %s199, %s202
      %p208 = scmp.eq.s32.totalorder %s16, 0
      %p209 = por %p207, %p208
      %p210 = scmp.ne.s32.totalorder %s199, %s202
      %p211 = scmp.eq.s32.totalorder %s21, 1
      %p212 = por %p210, %p211
      %p213 = scmp.ne.s32.totalorder %s202, %s203
      %p214 = scmp.eq.s32.totalorder %s21, 0
      %p215 = por %p213, %p214
      %p216 = scmp.ne.s32.totalorder %s202, %s203
      %p217 = scmp.eq.s32.totalorder %s22, 1
      %p218 = por %p216, %p217
      %p220 = scmp.ne.s32.totalorder %s203, %s219
      %p221 = scmp.eq.s32.totalorder %s22, 0
      %p222 = por %p220, %p221
      %p223 = scmp.le.s32.totalorder 1, %s16
      %p224 = scmp.lt.s32.totalorder %s16, 3
      %p225 = pnand %p223, %p224
      %p226 = pneg %p225
      // Predicated region
      $region9: #{_decoder_res_impl.1} parent=5 // pred_check
        _
      $region10: #{_decoder_res_impl.1} parent=5 // pred_check_branch
        %228 = sbr.rel (%p225) target = $region12
      $region11: #{_decoder_res_impl.1} parent=5 // pred_region
        %s229 = ssub.s32 %s16, 1
        // Predicated region
        $region13: #{_decoder_res_impl.1} parent=11 // pred_check
          %p230 = pneg %p63
        $region14: #{_decoder_res_impl.1} parent=11 // pred_check_branch
          %232 = sbr.rel (%p230) target = $region16
        $region15: #{_decoder_res_impl.1} parent=11 // pred_region
          %s234 = ssub.s32 2048, 2048
          %235 = vsyncadd [#allocation3], %s234
          %s236 = sshll.u32 [#allocation2], 4
          %s237 = int_to_ptr.vmem [resolvable:$true] %s236
          %242 = dma.hbm_to_vmem [thread:$0]  %s1, 2048, %s237, [#allocation3], 128, 128, 8
        $region16: #{_decoder_res_impl.1} parent=11 // pred_fallthru
          _
        // Predicated region
        $region17: #{_decoder_res_impl.1} parent=11 // pred_check
          %p243 = pneg %p84
        $region18: #{_decoder_res_impl.1} parent=11 // pred_check_branch
          %245 = sbr.rel (%p243) target = $region20
        $region19: #{_decoder_res_impl.1} parent=11 // pred_region
          _
        $region20: #{_decoder_res_impl.1} parent=11 // pred_fallthru
          _
        // Predicated region
        $region21: #{_decoder_res_impl.1} parent=11 // pred_check
          %p246 = pneg %p105
        $region22: #{_decoder_res_impl.1} parent=11 // pred_check_branch
          %248 = sbr.rel (%p246) target = $region24
        $region23: #{_decoder_res_impl.1} parent=11 // pred_region
          _
        $region24: #{_decoder_res_impl.1} parent=11 // pred_fallthru
          _
        // Predicated region
        $region25: #{_decoder_res_impl.1} parent=11 // pred_check
          %p249 = pneg %p126
        $region26: #{_decoder_res_impl.1} parent=11 // pred_check_branch
          %251 = sbr.rel (%p249) target = $region28
        $region27: #{_decoder_res_impl.1} parent=11 // pred_region
          _
        $region28: #{_decoder_res_impl.1} parent=11 // pred_fallthru
          _
        // Predicated region
        $region29: #{_decoder_res_impl.1} parent=11 // pred_check
          %p252 = pneg %p147
        $region30: #{_decoder_res_impl.1} parent=11 // pred_check_branch
          %254 = sbr.rel (%p252) target = $region32
        $region31: #{_decoder_res_impl.1} parent=11 // pred_region
          %s256 = ssub.s32 2048, 2048
          %257 = vsyncadd [#allocation5], %s256
          %s258 = sshll.u32 [#allocation4], 4
          %s259 = int_to_ptr.vmem [resolvable:$true] %s258
          %264 = dma.hbm_to_vmem [thread:$0]  %s5, 2048, %s259, [#allocation5], 128, 128, 8
        $region32: #{_decoder_res_impl.1} parent=11 // pred_fallthru
          _
        // Predicated region
        $region33: #{_decoder_res_impl.1} parent=11 // pred_check
          %p265 = pneg %p168
        $region34: #{_decoder_res_impl.1} parent=11 // pred_check_branch
          %267 = sbr.rel (%p265) target = $region36
        $region35: #{_decoder_res_impl.1} parent=11 // pred_region
          _
        $region36: #{_decoder_res_impl.1} parent=11 // pred_fallthru
          _
        // Predicated region
        $region37: #{_decoder_res_impl.1} parent=11 // pred_check
          %p268 = pneg %p189
        $region38: #{_decoder_res_impl.1} parent=11 // pred_check_branch
          %270 = sbr.rel (%p268) target = $region40
        $region39: #{_decoder_res_impl.1} parent=11 // pred_region
          _
        $region40: #{_decoder_res_impl.1} parent=11 // pred_fallthru
          _
      $region12: #{_decoder_res_impl.1} parent=5 // pred_fallthru
        _
      %p271 = scmp.lt.s32.totalorder %s16, 2
      // Predicated region
      $region41: #{_decoder_res_impl.1} parent=5 // pred_check
        %p272 = pneg %p271
      $region42: #{_decoder_res_impl.1} parent=5 // pred_check_branch
        %274 = sbr.rel (%p272) target = $region44
      $region43: #{_decoder_res_impl.1} parent=5 // pred_region
        // Predicated region
        $region45: #{_decoder_res_impl.1} parent=43 // pred_check
          %p275 = pneg %p36
        $region46: #{_decoder_res_impl.1} parent=43 // pred_check_branch
          %277 = sbr.rel (%p275) target = $region48
        $region47: #{_decoder_res_impl.1} parent=43 // pred_region
          %p278 = scmp.lt.s32.totalorder %s16, 1
          %s279 = scalar_select %p278, %s16, 1
          %s280 = smul.addr %s279, 8
          %s281 = scalar_lea.vmem %s0, %s280
        $region48: #{_decoder_res_impl.1} parent=43 // pred_fallthru
          _
      $region44: #{_decoder_res_impl.1} parent=5 // pred_fallthru
        _
      %p282 = scmp.le.s32.totalorder 1, %s16
      %p283 = scmp.lt.s32.totalorder %s16, 3
      %p284 = pnand %p282, %p283
      %p285 = pneg %p284
      // Predicated region
      $region49: #{_decoder_res_impl.1} parent=5 // pred_check
        _
      $region50: #{_decoder_res_impl.1} parent=5 // pred_check_branch
        %287 = sbr.rel (%p284) target = $region52
      $region51: #{_decoder_res_impl.1} parent=5 // pred_region
        %s288 = ssub.s32 %s16, 1
        // Predicated region
        $region53: #{_decoder_res_impl.1} parent=51 // pred_check
          %p289 = pneg %p63
        $region54: #{_decoder_res_impl.1} parent=51 // pred_check_branch
          %291 = sbr.rel (%p289) target = $region56
        $region55: #{_decoder_res_impl.1} parent=51 // pred_region
          %292 = dma.done [#allocation3], 2048
        $region56: #{_decoder_res_impl.1} parent=51 // pred_fallthru
          _
        // Predicated region
        $region57: #{_decoder_res_impl.1} parent=51 // pred_check
          %p293 = pneg %p147
        $region58: #{_decoder_res_impl.1} parent=51 // pred_check_branch
          %295 = sbr.rel (%p293) target = $region60
        $region59: #{_decoder_res_impl.1} parent=51 // pred_region
          %296 = dma.done [#allocation5], 2048
        $region60: #{_decoder_res_impl.1} parent=51 // pred_fallthru
          _
        %p297 = scmp.lt.s32.totalorder %s21, 1
        %s298 = scalar_select %p297, %s21, 1
        %s299 = smul.addr %s298, 8
        %s300 = scalar_lea.vmem %s0, %s299
        %p301 = pneg %p42
        %p302 = pneg %p39
        %p303 = pneg %p63
        %p304 = pneg %p60
        %p305 = pneg %p84
        %p306 = pneg %p81
        %p307 = pneg %p105
        %p308 = pneg %p102
        %p309 = pneg %p126
        %p310 = pneg %p123
        %p311 = pneg %p147
        %p312 = pneg %p144
        %p313 = pneg %p168
        %p314 = pneg %p165
        %p315 = pneg %p189
        %p316 = pneg %p186
        %p317 = pneg %p215
        %p318 = pneg %p212
        %p319 = scmp.lt.s32.totalorder %s21, 1
        %s320 = scalar_select %p319, %s21, 1
        %s321 = smul.addr %s320, 8
        %s322 = scalar_lea.vmem %s8, %s321
        %p323 = scmp.lt.s32.totalorder %s21, 1
        %s324 = scalar_select %p323, %s21, 1
        %s325 = smul.addr %s324, 8
        %s326 = scalar_lea.vmem %s0, %s325
        %p327 = scmp.lt.s32.totalorder %s21, 1
        %s328 = scalar_select %p327, %s21, 1
        %s329 = smul.addr %s328, 8
        %s330 = scalar_lea.vmem %s8, %s329
        %v331 = vld [vmem:[%s326] sm:$0xff]
        %v332 = vld [vmem:[#allocation2] sm:$0xff]
        %v333 = vld [vmem:[#allocation2 + $0x8] sm:$0xff]
        %v334 = vld [vmem:[#allocation2 + $0x10] sm:$0xff]
        %v335 = vld [vmem:[#allocation2 + $0x18] sm:$0xff]
        %v336 = vld [vmem:[#allocation2 + $0x20] sm:$0xff]
        %v337 = vld [vmem:[#allocation2 + $0x28] sm:$0xff]
        %v338 = vld [vmem:[#allocation2 + $0x30] sm:$0xff]
        %v339 = vld [vmem:[#allocation2 + $0x38] sm:$0xff]
        %v340 = vld [vmem:[#allocation2 + $0x40] sm:$0xff]
        %v341 = vld [vmem:[#allocation2 + $0x48] sm:$0xff]
        %v342 = vld [vmem:[#allocation2 + $0x50] sm:$0xff]
        %v343 = vld [vmem:[#allocation2 + $0x58] sm:$0xff]
        %v344 = vld [vmem:[#allocation2 + $0x60] sm:$0xff]
        %v345 = vld [vmem:[#allocation2 + $0x68] sm:$0xff]
        %v346 = vld [vmem:[#allocation2 + $0x70] sm:$0xff]
        %v347 = vld [vmem:[#allocation2 + $0x78] sm:$0xff]
        %v348 = vld [vmem:[%s2] sm:$0x1]
        %v350 = vlaneseq
        %v351 = vshrl.u32 %v350, 7
        %v352 = vsub.s32 0, %v351
        %v353 = vrot.slane %v348, %v352
        %355 = vmatprep.subr.mxu0 0.0
        %356 = vmatpush1.msra.mxu0 %v332
        %357 = vmatprep.subr.mxu0 0.0
        %358 = vmatpush1.msra.mxu0 %v333
        %359 = vmatprep.subr.mxu0 0.0
        %360 = vmatpush1.msra.mxu0 %v334
        %361 = vmatprep.subr.mxu0 0.0
        %362 = vmatpush1.msra.mxu0 %v335
        %363 = vmatprep.subr.mxu0 0.0
        %364 = vmatpush1.msra.mxu0 %v336
        %365 = vmatprep.subr.mxu0 0.0
        %366 = vmatpush1.msra.mxu0 %v337
        %367 = vmatprep.subr.mxu0 0.0
        %368 = vmatpush1.msra.mxu0 %v338
        %369 = vmatprep.subr.mxu0 0.0
        %370 = vmatpush1.msra.mxu0 %v339
        %371 = vmatprep.subr.mxu0 0.0
        %372 = vmatpush1.msra.mxu0 %v340
        %373 = vmatprep.subr.mxu0 0.0
        %374 = vmatpush1.msra.mxu0 %v341
        %375 = vmatprep.subr.mxu0 0.0
        %376 = vmatpush1.msra.mxu0 %v342
        %377 = vmatprep.subr.mxu0 0.0
        %378 = vmatpush1.msra.mxu0 %v343
        %379 = vmatprep.subr.mxu0 0.0
        %380 = vmatpush1.msra.mxu0 %v344
        %381 = vmatprep.subr.mxu0 0.0
        %382 = vmatpush1.msra.mxu0 %v345
        %383 = vmatprep.subr.mxu0 0.0
        %384 = vmatpush1.msra.mxu0 %v346
        %385 = vmatprep.subr.mxu0 0.0
        %386 = vmatpush1.msra.mxu0 %v347
        %387 = vmatprep.subr.mxu0 0.0
        %388 = vmatpush1.msra.mxu0 0.0
        %389 = vmatprep.subr.mxu0 0.0
        %390 = vmatpush1.msra.mxu0 0.0
        %391 = vmatprep.subr.mxu0 0.0
        %392 = vmatpush1.msra.mxu0 0.0
        %393 = vmatprep.subr.mxu0 0.0
        %394 = vmatpush1.msra.mxu0 0.0
        %395 = vmatprep.subr.mxu0 0.0
        %396 = vmatpush1.msra.mxu0 0.0
        %397 = vmatprep.subr.mxu0 0.0
        %398 = vmatpush1.msra.mxu0 0.0
        %399 = vmatprep.subr.mxu0 0.0
        %400 = vmatpush1.msra.mxu0 0.0
        %401 = vmatprep.subr.mxu0 0.0
        %402 = vmatpush1.msra.mxu0 0.0
        %403 = vmatprep.subr.mxu0 0.0
        %404 = vmatpush1.msra.mxu0 0.0
        %405 = vmatprep.subr.mxu0 0.0
        %406 = vmatpush1.msra.mxu0 0.0
        %407 = vmatprep.subr.mxu0 0.0
        %408 = vmatpush1.msra.mxu0 0.0
        %409 = vmatprep.subr.mxu0 0.0
        %410 = vmatpush1.msra.mxu0 0.0
        %411 = vmatprep.subr.mxu0 0.0
        %412 = vmatpush1.msra.mxu0 0.0
        %413 = vmatprep.subr.mxu0 0.0
        %414 = vmatpush1.msra.mxu0 0.0
        %415 = vmatprep.subr.mxu0 0.0
        %416 = vmatpush1.msra.mxu0 0.0
        %417 = vmatprep.subr.mxu0 0.0
        %418 = vmatpush1.msra.mxu0 0.0
        %419 = vmatprep.mubr.f32.mxu0 0.0
        %420 = vmatmul.mubr.f32.gmra.mrb[0].mxu0 %v331
        %v421 = vpop.f32.mrb[0].mxu0
        %v422 = vadd.f32 %v353, %v421
        %v423 = vpop.f32.mrb[0].mxu0
        %424 = vdwg.mxu0
        %425 = vadd.xlane.f32.xlu0 %v422
        %v426 = vpop.xlane.xlu0 %425
        %v427 = vmul.f32 %v426, 0.03125
        %v428 = vsub.f32 %v422, %v427
        %v429 = vld [vmem:[%s7] sm:$0x1]
        %v431 = vlaneseq
        %v432 = vshrl.u32 %v431, 7
        %v433 = vsub.s32 0, %v432
        %v434 = vrot.slane %v429, %v433
        %v436 = vmul.f32 %v428, %v434
        %v437 = vmul.f32 %v436, %v436
        %438 = vadd.xlane.f32.xlu0 %v437
        %v439 = vpop.xlane.xlu0 %438
        %v440 = vmul.f32 %v439, 0.03125
        %v441 = vadd.f32 %v440, 1e-05
        %v442 = vrsqrt.pop %v441
        %v443 = vmul.f32 %v436, %v442
        %v444 = vld [vmem:[%s3] sm:$0x1]
        %v446 = vlaneseq
        %v447 = vshrl.u32 %v446, 7
        %v448 = vsub.s32 0, %v447
        %v449 = vrot.slane %v444, %v448
        %v451 = vmul.f32 %v443, %v449
        %v452 = vld [vmem:[%s4] sm:$0x1]
        %v454 = vlaneseq
        %v455 = vshrl.u32 %v454, 7
        %v456 = vsub.s32 0, %v455
        %v457 = vrot.slane %v452, %v456
        %v459 = vadd.f32 %v451, %v457
        %v460 = vmax.f32 %v459, 0.0
        %v461 = vadd.f32 %v331, %v460
        %v462 = vld [vmem:[#allocation4] sm:$0xff]
        %v463 = vld [vmem:[#allocation4 + $0x8] sm:$0xff]
        %v464 = vld [vmem:[#allocation4 + $0x10] sm:$0xff]
        %v465 = vld [vmem:[#allocation4 + $0x18] sm:$0xff]
        %v466 = vld [vmem:[#allocation4 + $0x20] sm:$0xff]
        %v467 = vld [vmem:[#allocation4 + $0x28] sm:$0xff]
        %v468 = vld [vmem:[#allocation4 + $0x30] sm:$0xff]
        %v469 = vld [vmem:[#allocation4 + $0x38] sm:$0xff]
        %v470 = vld [vmem:[#allocation4 + $0x40] sm:$0xff]
        %v471 = vld [vmem:[#allocation4 + $0x48] sm:$0xff]
        %v472 = vld [vmem:[#allocation4 + $0x50] sm:$0xff]
        %v473 = vld [vmem:[#allocation4 + $0x58] sm:$0xff]
        %v474 = vld [vmem:[#allocation4 + $0x60] sm:$0xff]
        %v475 = vld [vmem:[#allocation4 + $0x68] sm:$0xff]
        %v476 = vld [vmem:[#allocation4 + $0x70] sm:$0xff]
        %v477 = vld [vmem:[#allocation4 + $0x78] sm:$0xff]
        %v478 = vld [vmem:[%s6] sm:$0x1]
        %v480 = vlaneseq
        %v481 = vshrl.u32 %v480, 7
        %v482 = vsub.s32 0, %v481
        %v483 = vrot.slane %v478, %v482
        %485 = vmatprep.subr.mxu0 0.0
        %486 = vmatpush1.msra.mxu0 %v462
        %487 = vmatprep.subr.mxu0 0.0
        %488 = vmatpush1.msra.mxu0 %v463
        %489 = vmatprep.subr.mxu0 0.0
        %490 = vmatpush1.msra.mxu0 %v464
        %491 = vmatprep.subr.mxu0 0.0
        %492 = vmatpush1.msra.mxu0 %v465
        %493 = vmatprep.subr.mxu0 0.0
        %494 = vmatpush1.msra.mxu0 %v466
        %495 = vmatprep.subr.mxu0 0.0
        %496 = vmatpush1.msra.mxu0 %v467
        %497 = vmatprep.subr.mxu0 0.0
        %498 = vmatpush1.msra.mxu0 %v468
        %499 = vmatprep.subr.mxu0 0.0
        %500 = vmatpush1.msra.mxu0 %v469
        %501 = vmatprep.subr.mxu0 0.0
        %502 = vmatpush1.msra.mxu0 %v470
        %503 = vmatprep.subr.mxu0 0.0
        %504 = vmatpush1.msra.mxu0 %v471
        %505 = vmatprep.subr.mxu0 0.0
        %506 = vmatpush1.msra.mxu0 %v472
        %507 = vmatprep.subr.mxu0 0.0
        %508 = vmatpush1.msra.mxu0 %v473
        %509 = vmatprep.subr.mxu0 0.0
        %510 = vmatpush1.msra.mxu0 %v474
        %511 = vmatprep.subr.mxu0 0.0
        %512 = vmatpush1.msra.mxu0 %v475
        %513 = vmatprep.subr.mxu0 0.0
        %514 = vmatpush1.msra.mxu0 %v476
        %515 = vmatprep.subr.mxu0 0.0
        %516 = vmatpush1.msra.mxu0 %v477
        %517 = vmatprep.subr.mxu0 0.0
        %518 = vmatpush1.msra.mxu0 0.0
        %519 = vmatprep.subr.mxu0 0.0
        %520 = vmatpush1.msra.mxu0 0.0
        %521 = vmatprep.subr.mxu0 0.0
        %522 = vmatpush1.msra.mxu0 0.0
        %523 = vmatprep.subr.mxu0 0.0
        %524 = vmatpush1.msra.mxu0 0.0
        %525 = vmatprep.subr.mxu0 0.0
        %526 = vmatpush1.msra.mxu0 0.0
        %527 = vmatprep.subr.mxu0 0.0
        %528 = vmatpush1.msra.mxu0 0.0
        %529 = vmatprep.subr.mxu0 0.0
        %530 = vmatpush1.msra.mxu0 0.0
        %531 = vmatprep.subr.mxu0 0.0
        %532 = vmatpush1.msra.mxu0 0.0
        %533 = vmatprep.subr.mxu0 0.0
        %534 = vmatpush1.msra.mxu0 0.0
        %535 = vmatprep.subr.mxu0 0.0
        %536 = vmatpush1.msra.mxu0 0.0
        %537 = vmatprep.subr.mxu0 0.0
        %538 = vmatpush1.msra.mxu0 0.0
        %539 = vmatprep.subr.mxu0 0.0
        %540 = vmatpush1.msra.mxu0 0.0
        %541 = vmatprep.subr.mxu0 0.0
        %542 = vmatpush1.msra.mxu0 0.0
        %543 = vmatprep.subr.mxu0 0.0
        %544 = vmatpush1.msra.mxu0 0.0
        %545 = vmatprep.subr.mxu0 0.0
        %546 = vmatpush1.msra.mxu0 0.0
        %547 = vmatprep.subr.mxu0 0.0
        %548 = vmatpush1.msra.mxu0 0.0
        %549 = vmatprep.mubr.f32.mxu0 0.0
        %550 = vmatmul.mubr.f32.gmra.mrb[0].mxu0 %v461
        %v551 = vpop.f32.mrb[0].mxu0
        %v552 = vadd.f32 %v483, %v551
        %v553 = vpop.f32.mrb[0].mxu0
        %554 = vdwg.mxu0
        %555 = vst [vmem:[%s330] sm:$0xff] %v552
        %p556 = scmp.lt.s32.totalorder %s21, 1
        %s557 = scalar_select %p556, %s21, 1
        %s558 = smul.addr %s557, 8
        %s559 = scalar_lea.vmem %s8, %s558
        // Predicated region
        $region61: #{_decoder_res_impl.1} parent=51 // pred_check
          %p560 = pneg %p212
        $region62: #{_decoder_res_impl.1} parent=51 // pred_check_branch
          %562 = sbr.rel (%p560) target = $region64
        $region63: #{_decoder_res_impl.1} parent=51 // pred_region
          _
        $region64: #{_decoder_res_impl.1} parent=51 // pred_fallthru
          _
      $region52: #{_decoder_res_impl.1} parent=5 // pred_fallthru
        _
      %p563 = scmp.le.s32.totalorder 2, %s16
      // Predicated region
      $region65: #{_decoder_res_impl.1} parent=5 // pred_check
        %p564 = pneg %p563
      $region66: #{_decoder_res_impl.1} parent=5 // pred_check_branch
        %566 = sbr.rel (%p564) target = $region68
      $region67: #{_decoder_res_impl.1} parent=5 // pred_region
        %s567 = ssub.s32 %s16, 2
        // Predicated region
        $region69: #{_decoder_res_impl.1} parent=67 // pred_check
          %p568 = pneg %p218
        $region70: #{_decoder_res_impl.1} parent=67 // pred_check_branch
          %570 = sbr.rel (%p568) target = $region72
        $region71: #{_decoder_res_impl.1} parent=67 // pred_region
          %p571 = scmp.lt.s32.totalorder %s22, 1
          %s572 = scalar_select %p571, %s22, 1
          %s573 = smul.addr %s572, 8
          %s574 = scalar_lea.vmem %s8, %s573
        $region72: #{_decoder_res_impl.1} parent=67 // pred_fallthru
          _
      $region68: #{_decoder_res_impl.1} parent=5 // pred_fallthru
        _
    $region6: #{_decoder_res_impl.1} parent=1 // loop_footer
      %s20 = sadd.s32 1, %s16
    $region7: #{_decoder_res_impl.1} parent=1 // loop_footer_branch
      %15 = sbr.rel target = $region3
    $region8: #{_decoder_res_impl.1} parent=1 // loop_exit
      _
    %575 = vsyncpa [#allocation3], 1
    %s576 = scalar_lea.sflag [#allocation3], 1
    %577 = vsyncpa %s576, 1
    %578 = vsyncpa [#allocation5], 1

// kernel: _decoder_res_impl.1
$region0: #{_decoder_res_impl.1}
  #allocation0 [shape = 'u32[]', space=smem, size = 0x4, offset = 0x4, fixed_abs, tag = 'smem constant byte address 0x4 - core index']
  #allocation1 [shape = 'u32[144,128]{1,0:T(1,128)}', space=vmem, size = 0x12000, scoped, tag = 'internal scratch']
  %s0 = inlined_call_operand.vmem [shape: f32[16,128], index: 0, kind: input, shape index: {}]
  %s1 = inlined_call_operand.hbm [shape: f32[128,128], index: 1, kind: input, shape index: {}]
  %s2 = inlined_call_operand.vmem [shape: f32[1,128], index: 2, kind: input, shape index: {}]
  %s3 = inlined_call_operand.vmem [shape: f32[1,128], index: 3, kind: input, shape index: {}]
  %s4 = inlined_call_operand.vmem [shape: f32[1,128], index: 4, kind: input, shape index: {}]
  %s5 = inlined_call_operand.hbm [shape: f32[128,128], index: 5, kind: input, shape index: {}]
  %s6 = inlined_call_operand.vmem [shape: f32[1,128], index: 6, kind: input, shape index: {}]
  %s7 = inlined_call_operand.vmem [shape: f32[1,128], index: 7, kind: input, shape index: {}]
  %s8 = inlined_call_operand.vmem [shape: f32[16,128], index: 8, kind: output, shape index: {}]
  %s9 = sld [smem:[#allocation0]]
  $region73: #{_decoder_res_impl.1} parent=0
    _
  %s11 = ssub.s32 1, %s9
  %s12 = scalar_select 0, %s11, %s9
  $region1: #{_decoder_res_impl.1} parent=0
    #allocation2 [shape = 'u8[65536]{0}', space=vmem, size = 0x10000, scoped, tag = 'input window, operand 1, single buffered']
    #allocation3 [shape = 's32[2]{0}', space=sflag, size = 0x8, scoped, tag = 'scoped memory for _decoder_res_impl.1']
    #allocation4 [shape = 'u8[65536]{0}', space=vmem, size = 0x10000, scoped, tag = 'input window, operand 5, single buffered']
    #allocation5 [shape = 's32[1]{0}', space=sflag, size = 0x4, scoped, tag = 'scoped memory for _decoder_res_impl.1']
    %13 = vsyncpa [#allocation3], 0
    %14 = vsyncpa [#allocation5], 0
    loop: start=0, step=1, limit=4
    $region2: #{_decoder_res_impl.1} parent=1 // loop_pre_header
      _
    $region3: #{_decoder_res_impl.1} parent=1 // loop_header
      %s16 = sphi 0, %s20
      %p17 = scmp.ge.s32.totalorder %s16, 4
      %s26 = sphi 0, %s28
      %s29 = sphi 0, %s26
      %s30 = sphi 0, %s29
      %s46 = sphi 0, %s30
      %s50 = sphi 0, %s50
      %s52 = sphi 0, %s50
      %s53 = sphi 0, %s52
      %s67 = sphi 0, %s53
      %s71 = sphi 0, %s71
      %s73 = sphi 0, %s71
      %s74 = sphi 0, %s73
      %s88 = sphi 0, %s74
      %s92 = sphi 0, %s92
      %s94 = sphi 0, %s92
      %s95 = sphi 0, %s94
      %s109 = sphi 0, %s95
      %s113 = sphi 0, %s113
      %s115 = sphi 0, %s113
      %s116 = sphi 0, %s115
      %s130 = sphi 0, %s116
      %s134 = sphi 0, %s134
      %s136 = sphi 0, %s134
      %s137 = sphi 0, %s136
      %s151 = sphi 0, %s137
      %s155 = sphi 0, %s155
      %s157 = sphi 0, %s155
      %s158 = sphi 0, %s157
      %s172 = sphi 0, %s158
      %s176 = sphi 0, %s176
      %s178 = sphi 0, %s176
      %s179 = sphi 0, %s178
      %s193 = sphi 0, %s179
      %s199 = sphi 0, %s201
      %s202 = sphi 0, %s199
      %s203 = sphi 0, %s202
      %s219 = sphi 0, %s203
    $region4: #{_decoder_res_impl.1} parent=1 // loop_header_branch
      %19 = sbr.rel (%p17) target = $region8
    $region5: #{_decoder_res_impl.1} parent=1 // loop_body
      %s21 = ssub.s32 %s16, 1
      %s22 = ssub.s32 %s16, 2
      %s23 = sadd.s32 %s16, 1
      %s24 = ssub.s32 %s16, %s23
      %p25 = scmp.eq.s32.totalorder %s24, 0
      %s27 = sadd.s32 %s26, 1
      %s28 = scalar_select %p25, %s26, %s27
      %p31 = pneg %p25
      %p32 = scmp.eq.s32.totalorder %s16, 1
      %p33 = por %p31, %p32
      %p34 = scmp.ne.s32.totalorder %s26, %s29
      %p35 = scmp.eq.s32.totalorder %s16, 0
      %p36 = por %p34, %p35
      %p37 = scmp.ne.s32.totalorder %s26, %s29
      %p38 = scmp.eq.s32.totalorder %s21, 1
      %p39 = por %p37, %p38
      %p40 = scmp.ne.s32.totalorder %s29, %s30
      %p41 = scmp.eq.s32.totalorder %s21, 0
      %p42 = por %p40, %p41
      %p43 = scmp.ne.s32.totalorder %s29, %s30
      %p44 = scmp.eq.s32.totalorder %s22, 1
      %p45 = por %p43, %p44
      %p47 = scmp.ne.s32.totalorder %s30, %s46
      %p48 = scmp.eq.s32.totalorder %s22, 0
      %p49 = por %p47, %p48
      %s51 = sadd.s32 %s50, 1
      %p54 = scmp.eq.s32.totalorder %s16, 1
      %p55 = scmp.ne.s32.totalorder %s50, %s52
      %p56 = scmp.eq.s32.totalorder %s16, 0
      %p57 = por %p55, %p56
      %p58 = scmp.ne.s32.totalorder %s50, %s52
      %p59 = scmp.eq.s32.totalorder %s21, 1
      %p60 = por %p58, %p59
      %p61 = scmp.ne.s32.totalorder %s52, %s53
      %p62 = scmp.eq.s32.totalorder %s21, 0
      %p63 = por %p61, %p62
      %p64 = scmp.ne.s32.totalorder %s52, %s53
      %p65 = scmp.eq.s32.totalorder %s22, 1
      %p66 = por %p64, %p65
      %p68 = scmp.ne.s32.totalorder %s53, %s67
      %p69 = scmp.eq.s32.totalorder %s22, 0
      %p70 = por %p68, %p69
      %s72 = sadd.s32 %s71, 1
      %p75 = scmp.eq.s32.totalorder %s16, 1
      %p76 = scmp.ne.s32.totalorder %s71, %s73
      %p77 = scmp.eq.s32.totalorder %s16, 0
      %p78 = por %p76, %p77
      %p79 = scmp.ne.s32.totalorder %s71, %s73
      %p80 = scmp.eq.s32.totalorder %s21, 1
      %p81 = por %p79, %p80
      %p82 = scmp.ne.s32.totalorder %s73, %s74
      %p83 = scmp.eq.s32.totalorder %s21, 0
      %p84 = por %p82, %p83
      %p85 = scmp.ne.s32.totalorder %s73, %s74
      %p86 = scmp.eq.s32.totalorder %s22, 1
      %p87 = por %p85, %p86
      %p89 = scmp.ne.s32.totalorder %s74, %s88
      %p90 = scmp.eq.s32.totalorder %s22, 0
      %p91 = por %p89, %p90
      %s93 = sadd.s32 %s92, 1
      %p96 = scmp.eq.s32.totalorder %s16, 1
      %p97 = scmp.ne.s32.totalorder %s92, %s94
      %p98 = scmp.eq.s32.totalorder %s16, 0
      %p99 = por %p97, %p98
      %p100 = scmp.ne.s32.totalorder %s92, %s94
      %p101 = scmp.eq.s32.totalorder %s21, 1
      %p102 = por %p100, %p101
      %p103 = scmp.ne.s32.totalorder %s94, %s95
      %p104 = scmp.eq.s32.totalorder %s21, 0
      %p105 = por %p103, %p104
      %p106 = scmp.ne.s32.totalorder %s94, %s95
      %p107 = scmp.eq.s32.totalorder %s22, 1
      %p108 = por %p106, %p107
      %p110 = scmp.ne.s32.totalorder %s95, %s109
      %p111 = scmp.eq.s32.totalorder %s22, 0
      %p112 = por %p110, %p111
      %s114 = sadd.s32 %s113, 1
      %p117 = scmp.eq.s32.totalorder %s16, 1
      %p118 = scmp.ne.s32.totalorder %s113, %s115
      %p119 = scmp.eq.s32.totalorder %s16, 0
      %p120 = por %p118, %p119
      %p121 = scmp.ne.s32.totalorder %s113, %s115
      %p122 = scmp.eq.s32.totalorder %s21, 1
      %p123 = por %p121, %p122
      %p124 = scmp.ne.s32.totalorder %s115, %s116
      %p125 = scmp.eq.s32.totalorder %s21, 0
      %p126 = por %p124, %p125
      %p127 = scmp.ne.s32.totalorder %s115, %s116
      %p128 = scmp.eq.s32.totalorder %s22, 1
      %p129 = por %p127, %p128
      %p131 = scmp.ne.s32.totalorder %s116, %s130
      %p132 = scmp.eq.s32.totalorder %s22, 0
      %p133 = por %p131, %p132
      %s135 = sadd.s32 %s134, 1
      %p138 = scmp.eq.s32.totalorder %s16, 1
      %p139 = scmp.ne.s32.totalorder %s134, %s136
      %p140 = scmp.eq.s32.totalorder %s16, 0
      %p141 = por %p139, %p140
      %p142 = scmp.ne.s32.totalorder %s134, %s136
      %p143 = scmp.eq.s32.totalorder %s21, 1
      %p144 = por %p142, %p143
      %p145 = scmp.ne.s32.totalorder %s136, %s137
      %p146 = scmp.eq.s32.totalorder %s21, 0
      %p147 = por %p145, %p146
      %p148 = scmp.ne.s32.totalorder %s136, %s137
      %p149 = scmp.eq.s32.totalorder %s22, 1
      %p150 = por %p148, %p149
      %p152 = scmp.ne.s32.totalorder %s137, %s151
      %p153 = scmp.eq.s32.totalorder %s22, 0
      %p154 = por %p152, %p153
      %s156 = sadd.s32 %s155, 1
      %p159 = scmp.eq.s32.totalorder %s16, 1
      %p160 = scmp.ne.s32.totalorder %s155, %s157
      %p161 = scmp.eq.s32.totalorder %s16, 0
      %p162 = por %p160, %p161
      %p163 = scmp.ne.s32.totalorder %s155, %s157
      %p164 = scmp.eq.s32.totalorder %s21, 1
      %p165 = por %p163, %p164
      %p166 = scmp.ne.s32.totalorder %s157, %s158
      %p167 = scmp.eq.s32.totalorder %s21, 0
      %p168 = por %p166, %p167
      %p169 = scmp.ne.s32.totalorder %s157, %s158
      %p170 = scmp.eq.s32.totalorder %s22, 1
      %p171 = por %p169, %p170
      %p173 = scmp.ne.s32.totalorder %s158, %s172
      %p174 = scmp.eq.s32.totalorder %s22, 0
      %p175 = por %p173, %p174
      %s177 = sadd.s32 %s176, 1
      %p180 = scmp.eq.s32.totalorder %s16, 1
      %p181 = scmp.ne.s32.totalorder %s176, %s178
      %p182 = scmp.eq.s32.totalorder %s16, 0
      %p183 = por %p181, %p182
      %p184 = scmp.ne.s32.totalorder %s176, %s178
      %p185 = scmp.eq.s32.totalorder %s21, 1
      %p186 = por %p184, %p185
      %p187 = scmp.ne.s32.totalorder %s178, %s179
      %p188 = scmp.eq.s32.totalorder %s21, 0
      %p189 = por %p187, %p188
      %p190 = scmp.ne.s32.totalorder %s178, %s179
      %p191 = scmp.eq.s32.totalorder %s22, 1
      %p192 = por %p190, %p191
      %p194 = scmp.ne.s32.totalorder %s179, %s193
      %p195 = scmp.eq.s32.totalorder %s22, 0
      %p196 = por %p194, %p195
      %s197 = ssub.s32 %s16, %s23
      %p198 = scmp.eq.s32.totalorder %s197, 0
      %s200 = sadd.s32 %s199, 1
      %s201 = scalar_select %p198, %s199, %s200
      %p204 = pneg %p198
      %p205 = scmp.eq.s32.totalorder %s16, 1
      %p206 = por %p204, %p205
      %p207 = scmp.ne.s32.totalorder %s199, %s202
      %p208 = scmp.eq.s32.totalorder %s16, 0
      %p209 = por %p207, %p208
      %p210 = scmp.ne.s32.totalorder %s199, %s202
      %p211 = scmp.eq.s32.totalorder %s21, 1
      %p212 = por %p210, %p211
      %p213 = scmp.ne.s32.totalorder %s202, %s203
      %p214 = scmp.eq.s32.totalorder %s21, 0
      %p215 = por %p213, %p214
      %p216 = scmp.ne.s32.totalorder %s202, %s203
      %p217 = scmp.eq.s32.totalorder %s22, 1
      %p218 = por %p216, %p217
      %p220 = scmp.ne.s32.totalorder %s203, %s219
      %p221 = scmp.eq.s32.totalorder %s22, 0
      %p222 = por %p220, %p221
      %p223 = scmp.le.s32.totalorder 1, %s16
      %p224 = scmp.lt.s32.totalorder %s16, 3
      %p225 = pnand %p223, %p224
      %p226 = pneg %p225
      // Predicated region
      $region9: #{_decoder_res_impl.1} parent=5 // pred_check
        _
      $region10: #{_decoder_res_impl.1} parent=5 // pred_check_branch
        %228 = sbr.rel (%p225) target = $region12
      $region11: #{_decoder_res_impl.1} parent=5 // pred_region
        %s229 = ssub.s32 %s16, 1
        // Predicated region
        $region13: #{_decoder_res_impl.1} parent=11 // pred_check
          %p230 = pneg %p63
        $region14: #{_decoder_res_impl.1} parent=11 // pred_check_branch
          %232 = sbr.rel (%p230) target = $region16
        $region15: #{_decoder_res_impl.1} parent=11 // pred_region
          %s234 = ssub.s32 2048, 2048
          %235 = vsyncadd [#allocation3], %s234
          %s236 = sshll.u32 [#allocation2], 4
          %s237 = int_to_ptr.vmem [resolvable:$true] %s236
          %242 = dma.hbm_to_vmem [thread:$0]  %s1, 2048, %s237, [#allocation3], 128, 128, 8
        $region16: #{_decoder_res_impl.1} parent=11 // pred_fallthru
          _
        // Predicated region
        $region17: #{_decoder_res_impl.1} parent=11 // pred_check
          %p243 = pneg %p84
        $region18: #{_decoder_res_impl.1} parent=11 // pred_check_branch
          %245 = sbr.rel (%p243) target = $region20
        $region19: #{_decoder_res_impl.1} parent=11 // pred_region
          _
        $region20: #{_decoder_res_impl.1} parent=11 // pred_fallthru
          _
        // Predicated region
        $region21: #{_decoder_res_impl.1} parent=11 // pred_check
          %p246 = pneg %p105
        $region22: #{_decoder_res_impl.1} parent=11 // pred_check_branch
          %248 = sbr.rel (%p246) target = $region24
        $region23: #{_decoder_res_impl.1} parent=11 // pred_region
          _
        $region24: #{_decoder_res_impl.1} parent=11 // pred_fallthru
          _
        // Predicated region
        $region25: #{_decoder_res_impl.1} parent=11 // pred_check
          %p249 = pneg %p126
        $region26: #{_decoder_res_impl.1} parent=11 // pred_check_branch
          %251 = sbr.rel (%p249) target = $region28
        $region27: #{_decoder_res_impl.1} parent=11 // pred_region
          _
        $region28: #{_decoder_res_impl.1} parent=11 // pred_fallthru
          _
        // Predicated region
        $region29: #{_decoder_res_impl.1} parent=11 // pred_check
          %p252 = pneg %p147
        $region30: #{_decoder_res_impl.1} parent=11 // pred_check_branch
          %254 = sbr.rel (%p252) target = $region32
        $region31: #{_decoder_res_impl.1} parent=11 // pred_region
          %s256 = ssub.s32 2048, 2048
          %257 = vsyncadd [#allocation5], %s256
          %s258 = sshll.u32 [#allocation4], 4
          %s259 = int_to_ptr.vmem [resolvable:$true] %s258
          %264 = dma.hbm_to_vmem [thread:$0]  %s5, 2048, %s259, [#allocation5], 128, 128, 8
        $region32: #{_decoder_res_impl.1} parent=11 // pred_fallthru
          _
        // Predicated region
        $region33: #{_decoder_res_impl.1} parent=11 // pred_check
          %p265 = pneg %p168
        $region34: #{_decoder_res_impl.1} parent=11 // pred_check_branch
          %267 = sbr.rel (%p265) target = $region36
        $region35: #{_decoder_res_impl.1} parent=11 // pred_region
          _
        $region36: #{_decoder_res_impl.1} parent=11 // pred_fallthru
          _
        // Predicated region
        $region37: #{_decoder_res_impl.1} parent=11 // pred_check
          %p268 = pneg %p189
        $region38: #{_decoder_res_impl.1} parent=11 // pred_check_branch
          %270 = sbr.rel (%p268) target = $region40
        $region39: #{_decoder_res_impl.1} parent=11 // pred_region
          _
        $region40: #{_decoder_res_impl.1} parent=11 // pred_fallthru
          _
      $region12: #{_decoder_res_impl.1} parent=5 // pred_fallthru
        _
      %p271 = scmp.lt.s32.totalorder %s16, 2
      // Predicated region
      $region41: #{_decoder_res_impl.1} parent=5 // pred_check
        %p272 = pneg %p271
      $region42: #{_decoder_res_impl.1} parent=5 // pred_check_branch
        %274 = sbr.rel (%p272) target = $region44
      $region43: #{_decoder_res_impl.1} parent=5 // pred_region
        // Predicated region
        $region45: #{_decoder_res_impl.1} parent=43 // pred_check
          %p275 = pneg %p36
        $region46: #{_decoder_res_impl.1} parent=43 // pred_check_branch
          %277 = sbr.rel (%p275) target = $region48
        $region47: #{_decoder_res_impl.1} parent=43 // pred_region
          %p278 = scmp.lt.s32.totalorder %s16, 1
          %s279 = scalar_select %p278, %s16, 1
          %s280 = smul.addr %s279, 8
          %s281 = scalar_lea.vmem %s0, %s280
        $region48: #{_decoder_res_impl.1} parent=43 // pred_fallthru
          _
      $region44: #{_decoder_res_impl.1} parent=5 // pred_fallthru
        _
      %p282 = scmp.le.s32.totalorder 1, %s16
      %p283 = scmp.lt.s32.totalorder %s16, 3
      %p284 = pnand %p282, %p283
      %p285 = pneg %p284
      // Predicated region
      $region49: #{_decoder_res_impl.1} parent=5 // pred_check
        _
      $region50: #{_decoder_res_impl.1} parent=5 // pred_check_branch
        %287 = sbr.rel (%p284) target = $region52
      $region51: #{_decoder_res_impl.1} parent=5 // pred_region
        %s288 = ssub.s32 %s16, 1
        // Predicated region
        $region53: #{_decoder_res_impl.1} parent=51 // pred_check
          %p289 = pneg %p63
        $region54: #{_decoder_res_impl.1} parent=51 // pred_check_branch
          %291 = sbr.rel (%p289) target = $region56
        $region55: #{_decoder_res_impl.1} parent=51 // pred_region
          %292 = dma.done [#allocation3], 2048
        $region56: #{_decoder_res_impl.1} parent=51 // pred_fallthru
          _
        // Predicated region
        $region57: #{_decoder_res_impl.1} parent=51 // pred_check
          %p293 = pneg %p147
        $region58: #{_decoder_res_impl.1} parent=51 // pred_check_branch
          %295 = sbr.rel (%p293) target = $region60
        $region59: #{_decoder_res_impl.1} parent=51 // pred_region
          %296 = dma.done [#allocation5], 2048
        $region60: #{_decoder_res_impl.1} parent=51 // pred_fallthru
          _
        %p297 = scmp.lt.s32.totalorder %s21, 1
        %s298 = scalar_select %p297, %s21, 1
        %s299 = smul.addr %s298, 8
        %s300 = scalar_lea.vmem %s0, %s299
        %p301 = pneg %p42
        %p302 = pneg %p39
        %p303 = pneg %p63
        %p304 = pneg %p60
        %p305 = pneg %p84
        %p306 = pneg %p81
        %p307 = pneg %p105
        %p308 = pneg %p102
        %p309 = pneg %p126
        %p310 = pneg %p123
        %p311 = pneg %p147
        %p312 = pneg %p144
        %p313 = pneg %p168
        %p314 = pneg %p165
        %p315 = pneg %p189
        %p316 = pneg %p186
        %p317 = pneg %p215
        %p318 = pneg %p212
        %p319 = scmp.lt.s32.totalorder %s21, 1
        %s320 = scalar_select %p319, %s21, 1
        %s321 = smul.addr %s320, 8
        %s322 = scalar_lea.vmem %s8, %s321
        %p323 = scmp.lt.s32.totalorder %s21, 1
        %s324 = scalar_select %p323, %s21, 1
        %s325 = smul.addr %s324, 8
        %s326 = scalar_lea.vmem %s0, %s325
        %p327 = scmp.lt.s32.totalorder %s21, 1
        %s328 = scalar_select %p327, %s21, 1
        %s329 = smul.addr %s328, 8
        %s330 = scalar_lea.vmem %s8, %s329
        %v331 = vld [vmem:[%s326] sm:$0xff]
        %v332 = vld [vmem:[#allocation2] sm:$0xff]
        %v333 = vld [vmem:[#allocation2 + $0x8] sm:$0xff]
        %v334 = vld [vmem:[#allocation2 + $0x10] sm:$0xff]
        %v335 = vld [vmem:[#allocation2 + $0x18] sm:$0xff]
        %v336 = vld [vmem:[#allocation2 + $0x20] sm:$0xff]
        %v337 = vld [vmem:[#allocation2 + $0x28] sm:$0xff]
        %v338 = vld [vmem:[#allocation2 + $0x30] sm:$0xff]
        %v339 = vld [vmem:[#allocation2 + $0x38] sm:$0xff]
        %v340 = vld [vmem:[#allocation2 + $0x40] sm:$0xff]
        %v341 = vld [vmem:[#allocation2 + $0x48] sm:$0xff]
        %v342 = vld [vmem:[#allocation2 + $0x50] sm:$0xff]
        %v343 = vld [vmem:[#allocation2 + $0x58] sm:$0xff]
        %v344 = vld [vmem:[#allocation2 + $0x60] sm:$0xff]
        %v345 = vld [vmem:[#allocation2 + $0x68] sm:$0xff]
        %v346 = vld [vmem:[#allocation2 + $0x70] sm:$0xff]
        %v347 = vld [vmem:[#allocation2 + $0x78] sm:$0xff]
        %v348 = vld [vmem:[%s2] sm:$0x1]
        %v350 = vlaneseq
        %v351 = vshrl.u32 %v350, 7
        %v352 = vsub.s32 0, %v351
        %v353 = vrot.slane %v348, %v352
        %355 = vmatprep.subr.mxu0 0.0
        %356 = vmatpush1.msra.mxu0 %v332
        %357 = vmatprep.subr.mxu0 0.0
        %358 = vmatpush1.msra.mxu0 %v333
        %359 = vmatprep.subr.mxu0 0.0
        %360 = vmatpush1.msra.mxu0 %v334
        %361 = vmatprep.subr.mxu0 0.0
        %362 = vmatpush1.msra.mxu0 %v335
        %363 = vmatprep.subr.mxu0 0.0
        %364 = vmatpush1.msra.mxu0 %v336
        %365 = vmatprep.subr.mxu0 0.0
        %366 = vmatpush1.msra.mxu0 %v337
        %367 = vmatprep.subr.mxu0 0.0
        %368 = vmatpush1.msra.mxu0 %v338
        %369 = vmatprep.subr.mxu0 0.0
        %370 = vmatpush1.msra.mxu0 %v339
        %371 = vmatprep.subr.mxu0 0.0
        %372 = vmatpush1.msra.mxu0 %v340
        %373 = vmatprep.subr.mxu0 0.0
        %374 = vmatpush1.msra.mxu0 %v341
        %375 = vmatprep.subr.mxu0 0.0
        %376 = vmatpush1.msra.mxu0 %v342
        %377 = vmatprep.subr.mxu0 0.0
        %378 = vmatpush1.msra.mxu0 %v343
        %379 = vmatprep.subr.mxu0 0.0
        %380 = vmatpush1.msra.mxu0 %v344
        %381 = vmatprep.subr.mxu0 0.0
        %382 = vmatpush1.msra.mxu0 %v345
        %383 = vmatprep.subr.mxu0 0.0
        %384 = vmatpush1.msra.mxu0 %v346
        %385 = vmatprep.subr.mxu0 0.0
        %386 = vmatpush1.msra.mxu0 %v347
        %387 = vmatprep.subr.mxu0 0.0
        %388 = vmatpush1.msra.mxu0 0.0
        %389 = vmatprep.subr.mxu0 0.0
        %390 = vmatpush1.msra.mxu0 0.0
        %391 = vmatprep.subr.mxu0 0.0
        %392 = vmatpush1.msra.mxu0 0.0
        %393 = vmatprep.subr.mxu0 0.0
        %394 = vmatpush1.msra.mxu0 0.0
        %395 = vmatprep.subr.mxu0 0.0
        %396 = vmatpush1.msra.mxu0 0.0
        %397 = vmatprep.subr.mxu0 0.0
        %398 = vmatpush1.msra.mxu0 0.0
        %399 = vmatprep.subr.mxu0 0.0
        %400 = vmatpush1.msra.mxu0 0.0
        %401 = vmatprep.subr.mxu0 0.0
        %402 = vmatpush1.msra.mxu0 0.0
        %403 = vmatprep.subr.mxu0 0.0
        %404 = vmatpush1.msra.mxu0 0.0
        %405 = vmatprep.subr.mxu0 0.0
        %406 = vmatpush1.msra.mxu0 0.0
        %407 = vmatprep.subr.mxu0 0.0
        %408 = vmatpush1.msra.mxu0 0.0
        %409 = vmatprep.subr.mxu0 0.0
        %410 = vmatpush1.msra.mxu0 0.0
        %411 = vmatprep.subr.mxu0 0.0
        %412 = vmatpush1.msra.mxu0 0.0
        %413 = vmatprep.subr.mxu0 0.0
        %414 = vmatpush1.msra.mxu0 0.0
        %415 = vmatprep.subr.mxu0 0.0
        %416 = vmatpush1.msra.mxu0 0.0
        %417 = vmatprep.subr.mxu0 0.0
        %418 = vmatpush1.msra.mxu0 0.0
        %419 = vmatprep.mubr.f32.mxu0 0.0
        %420 = vmatmul.mubr.f32.gmra.mrb[0].mxu0 %v331
        %v421 = vpop.f32.mrb[0].mxu0
        %v422 = vadd.f32 %v353, %v421
        %v423 = vpop.f32.mrb[0].mxu0
        %424 = vdwg.mxu0
        %425 = vadd.xlane.f32.xlu0 %v422
        %v426 = vpop.xlane.xlu0 %425
        %v427 = vmul.f32 %v426, 0.03125
        %v428 = vsub.f32 %v422, %v427
        %v429 = vld [vmem:[%s7] sm:$0x1]
        %v431 = vlaneseq
        %v432 = vshrl.u32 %v431, 7
        %v433 = vsub.s32 0, %v432
        %v434 = vrot.slane %v429, %v433
        %v436 = vmul.f32 %v428, %v434
        %v437 = vmul.f32 %v436, %v436
        %438 = vadd.xlane.f32.xlu0 %v437
        %v439 = vpop.xlane.xlu0 %438
        %v440 = vmul.f32 %v439, 0.03125
        %v441 = vadd.f32 %v440, 1e-05
        %v442 = vrsqrt.pop %v441
        %v443 = vmul.f32 %v436, %v442
        %v444 = vld [vmem:[%s3] sm:$0x1]
        %v446 = vlaneseq
        %v447 = vshrl.u32 %v446, 7
        %v448 = vsub.s32 0, %v447
        %v449 = vrot.slane %v444, %v448
        %v451 = vmul.f32 %v443, %v449
        %v452 = vld [vmem:[%s4] sm:$0x1]
        %v454 = vlaneseq
        %v455 = vshrl.u32 %v454, 7
        %v456 = vsub.s32 0, %v455
        %v457 = vrot.slane %v452, %v456
        %v459 = vadd.f32 %v451, %v457
        %v460 = vmax.f32 %v459, 0.0
        %v461 = vadd.f32 %v331, %v460
        %v462 = vld [vmem:[#allocation4] sm:$0xff]
        %v463 = vld [vmem:[#allocation4 + $0x8] sm:$0xff]
        %v464 = vld [vmem:[#allocation4 + $0x10] sm:$0xff]
        %v465 = vld [vmem:[#allocation4 + $0x18] sm:$0xff]
        %v466 = vld [vmem:[#allocation4 + $0x20] sm:$0xff]
        %v467 = vld [vmem:[#allocation4 + $0x28] sm:$0xff]
        %v468 = vld [vmem:[#allocation4 + $0x30] sm:$0xff]
        %v469 = vld [vmem:[#allocation4 + $0x38] sm:$0xff]
        %v470 = vld [vmem:[#allocation4 + $0x40] sm:$0xff]
        %v471 = vld [vmem:[#allocation4 + $0x48] sm:$0xff]
        %v472 = vld [vmem:[#allocation4 + $0x50] sm:$0xff]
        %v473 = vld [vmem:[#allocation4 + $0x58] sm:$0xff]
        %v474 = vld [vmem:[#allocation4 + $0x60] sm:$0xff]
        %v475 = vld [vmem:[#allocation4 + $0x68] sm:$0xff]
        %v476 = vld [vmem:[#allocation4 + $0x70] sm:$0xff]
        %v477 = vld [vmem:[#allocation4 + $0x78] sm:$0xff]
        %v478 = vld [vmem:[%s6] sm:$0x1]
        %v480 = vlaneseq
        %v481 = vshrl.u32 %v480, 7
        %v482 = vsub.s32 0, %v481
        %v483 = vrot.slane %v478, %v482
        %485 = vmatprep.subr.mxu0 0.0
        %486 = vmatpush1.msra.mxu0 %v462
        %487 = vmatprep.subr.mxu0 0.0
        %488 = vmatpush1.msra.mxu0 %v463
        %489 = vmatprep.subr.mxu0 0.0
        %490 = vmatpush1.msra.mxu0 %v464
        %491 = vmatprep.subr.mxu0 0.0
        %492 = vmatpush1.msra.mxu0 %v465
        %493 = vmatprep.subr.mxu0 0.0
        %494 = vmatpush1.msra.mxu0 %v466
        %495 = vmatprep.subr.mxu0 0.0
        %496 = vmatpush1.msra.mxu0 %v467
        %497 = vmatprep.subr.mxu0 0.0
        %498 = vmatpush1.msra.mxu0 %v468
        %499 = vmatprep.subr.mxu0 0.0
        %500 = vmatpush1.msra.mxu0 %v469
        %501 = vmatprep.subr.mxu0 0.0
        %502 = vmatpush1.msra.mxu0 %v470
        %503 = vmatprep.subr.mxu0 0.0
        %504 = vmatpush1.msra.mxu0 %v471
        %505 = vmatprep.subr.mxu0 0.0
        %506 = vmatpush1.msra.mxu0 %v472
        %507 = vmatprep.subr.mxu0 0.0
        %508 = vmatpush1.msra.mxu0 %v473
        %509 = vmatprep.subr.mxu0 0.0
        %510 = vmatpush1.msra.mxu0 %v474
        %511 = vmatprep.subr.mxu0 0.0
        %512 = vmatpush1.msra.mxu0 %v475
        %513 = vmatprep.subr.mxu0 0.0
        %514 = vmatpush1.msra.mxu0 %v476
        %515 = vmatprep.subr.mxu0 0.0
        %516 = vmatpush1.msra.mxu0 %v477
        %517 = vmatprep.subr.mxu0 0.0
        %518 = vmatpush1.msra.mxu0 0.0
        %519 = vmatprep.subr.mxu0 0.0
        %520 = vmatpush1.msra.mxu0 0.0
        %521 = vmatprep.subr.mxu0 0.0
        %522 = vmatpush1.msra.mxu0 0.0
        %523 = vmatprep.subr.mxu0 0.0
        %524 = vmatpush1.msra.mxu0 0.0
        %525 = vmatprep.subr.mxu0 0.0
        %526 = vmatpush1.msra.mxu0 0.0
        %527 = vmatprep.subr.mxu0 0.0
        %528 = vmatpush1.msra.mxu0 0.0
        %529 = vmatprep.subr.mxu0 0.0
        %530 = vmatpush1.msra.mxu0 0.0
        %531 = vmatprep.subr.mxu0 0.0
        %532 = vmatpush1.msra.mxu0 0.0
        %533 = vmatprep.subr.mxu0 0.0
        %534 = vmatpush1.msra.mxu0 0.0
        %535 = vmatprep.subr.mxu0 0.0
        %536 = vmatpush1.msra.mxu0 0.0
        %537 = vmatprep.subr.mxu0 0.0
        %538 = vmatpush1.msra.mxu0 0.0
        %539 = vmatprep.subr.mxu0 0.0
        %540 = vmatpush1.msra.mxu0 0.0
        %541 = vmatprep.subr.mxu0 0.0
        %542 = vmatpush1.msra.mxu0 0.0
        %543 = vmatprep.subr.mxu0 0.0
        %544 = vmatpush1.msra.mxu0 0.0
        %545 = vmatprep.subr.mxu0 0.0
        %546 = vmatpush1.msra.mxu0 0.0
        %547 = vmatprep.subr.mxu0 0.0
        %548 = vmatpush1.msra.mxu0 0.0
        %549 = vmatprep.mubr.f32.mxu0 0.0
        %550 = vmatmul.mubr.f32.gmra.mrb[0].mxu0 %v461
        %v551 = vpop.f32.mrb[0].mxu0
        %v552 = vadd.f32 %v483, %v551
        %v553 = vpop.f32.mrb[0].mxu0
        %554 = vdwg.mxu0
        %555 = vst [vmem:[%s330] sm:$0xff] %v552
        %p556 = scmp.lt.s32.totalorder %s21, 1
        %s557 = scalar_select %p556, %s21, 1
        %s558 = smul.addr %s557, 8
        %s559 = scalar_lea.vmem %s8, %s558
        // Predicated region
        $region61: #{_decoder_res_impl.1} parent=51 // pred_check
          %p560 = pneg %p212
        $region62: #{_decoder_res_impl.1} parent=51 // pred_check_branch
          %562 = sbr.rel (%p560) target = $region64
        $region63: #{_decoder_res_impl.1} parent=51 // pred_region
          _
        $region64: #{_decoder_res_impl.1} parent=51 // pred_fallthru
          _
      $region52: #{_decoder_res_impl.1} parent=5 // pred_fallthru
        _
      %p563 = scmp.le.s32.totalorder 2, %s16
      // Predicated region
      $region65: #{_decoder_res_impl.1} parent=5 // pred_check
        %p564 = pneg %p563
      $region66: #{_decoder_res_impl.1} parent=5 // pred_check_branch
        %566 = sbr.rel (%p564) target = $region68
      $region67: #{_decoder_res_impl.1} parent=5 // pred_region
        %s567 = ssub.s32 %s16, 2
        // Predicated region
        $region69: #{_decoder_res_impl.1} parent=67 // pred_check
          %p568 = pneg %p218
        $region70: #{_decoder_res_impl.1} parent=67 // pred_check_branch
          %570 = sbr.rel (%p568) target = $region72
        $region71: #{_decoder_res_impl.1} parent=67 // pred_region
          %p571 = scmp.lt.s32.totalorder %s22, 1
          %s572 = scalar_select %p571, %s22, 1
          %s573 = smul.addr %s572, 8
          %s574 = scalar_lea.vmem %s8, %s573
        $region72: #{_decoder_res_impl.1} parent=67 // pred_fallthru
          _
      $region68: #{_decoder_res_impl.1} parent=5 // pred_fallthru
        _
    $region6: #{_decoder_res_impl.1} parent=1 // loop_footer
      %s20 = sadd.s32 1, %s16
    $region7: #{_decoder_res_impl.1} parent=1 // loop_footer_branch
      %15 = sbr.rel target = $region3
    $region8: #{_decoder_res_impl.1} parent=1 // loop_exit
      _
    %575 = vsyncpa [#allocation3], 1
    %s576 = scalar_lea.sflag [#allocation3], 1
    %577 = vsyncpa %s576, 1
    %578 = vsyncpa [#allocation5], 1

</llo_original>
